<compile_context>
chip_gen: v7x
topology: tpu7x:2x2x1
jax: 0.10.0
libtpu: 0.0.40
codegen_flags: <defaults>
</compile_context>

<pallas_src>
import functools

import jax
import jax.numpy as jnp
from jax import lax
from jax.experimental import pallas as pl
from jax.experimental.pallas import tpu as pltpu

LN_EPS = 1e-5


# ----------------------------------------------------------------------------
# helpers
# ----------------------------------------------------------------------------
def _round_up(x, m):
    return (x + m - 1) // m * m


def _vmem_budget():
    """Generation-aware VMEM scoped limit + planning budget (bytes)."""
    try:
        cap = pltpu.get_tpu_info().vmem_capacity_bytes
    except Exception:
        cap = 64 * 1024 * 1024                      # conservative (v7x per-TC)
    limit = max(32 * 1024 * 1024, cap * 3 // 4)     # ~96 MiB v5e/v6e, ~48 MiB v7x
    budget = limit - 4 * 1024 * 1024                # headroom for internal scratch
    return int(limit), int(budget)


def _pick_tm(n, sub, target):
    """Row-tile size: cover small N in one tile, else prefer divisors of N."""
    if n <= target:
        return max(sub, _round_up(n, sub))
    t = (target // sub) * sub
    while t >= sub:
        if n % t == 0:
            return t                                # no row padding needed
        t -= sub
    return target                                   # fall back: pad rows


def _layernorm_relu(y, g, beta):
    """Centered two-pass LayerNorm (+ affine) + ReLU on an f32 (tm, D) tile."""
    mean = jnp.mean(y, axis=-1, keepdims=True)
    yc = y - mean
    var = jnp.mean(yc * yc, axis=-1, keepdims=True)
    yn = yc * lax.rsqrt(var + LN_EPS)
    return jnp.maximum(yn * g + beta, 0.0)


# ----------------------------------------------------------------------------
# kernels
# ----------------------------------------------------------------------------
def _fused_kernel(x_ref, fw_ref, w_ref, b_ref, g_ref, beta_ref, o_ref, *,
                  precision):
    """Whole-K matmul + LayerNorm + ReLU for one (tm, D) row tile.

    fw (1, K) and W^T (K, D) have constant index_maps: resident in VMEM,
    fetched from HBM exactly once for the whole grid.
    """
    xw = x_ref[...] * fw_ref[...]                       # VPU, hidden under DMA
    y = jnp.dot(xw, w_ref[...],
                preferred_element_type=jnp.float32, precision=precision)
    y = y + b_ref[...]
    o_ref[...] = _layernorm_relu(y, g_ref[...], beta_ref[...]).astype(o_ref.dtype)


def _tiled_kernel(x_ref, fw_ref, w_ref, b_ref, g_ref, beta_ref, o_ref, *,
                  precision):
    """Fallback for very large K: accumulate directly into the f32 output
    block (its index_map is constant across the k axis, so it stays resident)."""
    k = pl.program_id(1)
    part = jnp.dot(x_ref[...] * fw_ref[...], w_ref[...],
                   preferred_element_type=jnp.float32, precision=precision)

    @pl.when(k == 0)
    def _():
        o_ref[...] = part

    @pl.when(k > 0)
    def _():
        o_ref[...] = o_ref[...] + part

    @pl.when(k == pl.num_programs(1) - 1)
    def _():
        y = o_ref[...] + b_ref[...]
        o_ref[...] = _layernorm_relu(y, g_ref[...], beta_ref[...])


# ----------------------------------------------------------------------------
# wrapper
# ----------------------------------------------------------------------------
@functools.partial(
    jax.jit,
    static_argnames=("sequence_length", "tm", "tk", "use_bf16", "force_tiled"))
def handcrafted_branch(x, fixed_weights, w_t, bias, gamma, beta, *,
                       sequence_length=None, tm=None, tk=1024,
                       use_bf16=True, force_tiled=False):
    """
    x:             (N, K)  float32
    fixed_weights: (K,)    float32
    w_t:           (K, D)  float32   (transpose of PyTorch Linear.weight (D, K))
    bias/gamma/beta: (D,)  float32
    returns (N, D), or (N, F, D) if sequence_length=F is given.
    """
    N, K = x.shape
    D = w_t.shape[1]
    out_dtype = x.dtype

    vmem_limit, vmem_budget = _vmem_budget()

    # Operand dtype: bf16 is MXU-native on v5e/v6e/v7x and halves the dominant
    # x HBM stream; accumulation and the LN epilogue stay in f32.
    op_dtype = jnp.bfloat16 if use_bf16 else x.dtype
    isz = jnp.dtype(op_dtype).itemsize
    sub = 16 if isz == 2 else 8
    precision = (jax.lax.Precision.HIGHEST
                 if jnp.dtype(op_dtype) == jnp.dtype(jnp.float32) else None)

    # --- row-tile selection (static under jit) ------------------------------
    if tm is None:
        target_tm = 512 if vmem_budget >= 40 * 1024 * 1024 else 256
        tm = _pick_tm(N, sub, target_tm)
        # v7x megacore: give the parallel row axis >=2 steps for medium/large
        # batches (harmless extra grid step on 1-TC v5e/v6e).
        if N >= 256 and _round_up(N, tm) // tm < 2:
            tm = max(sub, _round_up(_round_up(N, sub) // 2, sub))
    else:
        tm = max(sub, _round_up(min(tm, _round_up(N, sub)), sub))
    Np = _round_up(N, tm)

    # --- operands (no K padding, no per-call weight folding) ----------------
    x_op = x.astype(op_dtype)
    fw_op = fixed_weights.reshape(1, K).astype(op_dtype)
    w_op = w_t.astype(op_dtype)
    b2 = bias.reshape(1, D).astype(jnp.float32)
    g2 = gamma.reshape(1, D).astype(jnp.float32)
    beta2 = beta.reshape(1, D).astype(jnp.float32)

    # Row padding only when N is not a multiple of tm (tile picker prefers
    # divisors, so this is usually a no-op).
    if Np != N:
        x_op = jnp.pad(x_op, ((0, Np - N), (0, 0)))

    # --- fused vs K-tiled decision (resident-W counted once) ----------------
    fused_bytes = (2 * tm * K * isz          # x tile, double-buffered
                   + K * D * isz             # W^T resident (constant index_map)
                   + K * isz                 # fixed_weights resident
                   + 2 * tm * D * 4          # output tile, double-buffered (f32)
                   + 3 * D * 4)              # bias / gamma / beta
    use_fused = (not force_tiled) and (fused_bytes <= vmem_budget)

    if use_fused:
        out = pl.pallas_call(
            functools.partial(_fused_kernel, precision=precision),
            out_shape=jax.ShapeDtypeStruct((Np, D), out_dtype),
            grid=(Np // tm,),
            in_specs=[
                pl.BlockSpec((tm, K), lambda i: (i, 0)),   # x (full-K block)
                pl.BlockSpec((1, K), lambda i: (0, 0)),    # fixed_weights, resident
                pl.BlockSpec((K, D), lambda i: (0, 0)),    # W^T, resident
                pl.BlockSpec((1, D), lambda i: (0, 0)),    # bias
                pl.BlockSpec((1, D), lambda i: (0, 0)),    # LN gamma
                pl.BlockSpec((1, D), lambda i: (0, 0)),    # LN beta
            ],
            out_specs=pl.BlockSpec((tm, D), lambda i: (i, 0)),
            compiler_params=pltpu.CompilerParams(
                dimension_semantics=("parallel",),
                vmem_limit_bytes=vmem_limit),
        )(x_op, fw_op, w_op, b2, g2, beta2)
    else:
        # K-tiled fallback (very large K): pad K to a tile multiple (zeros
        # contribute 0), accumulate into the resident f32 output block.
        tk = max(128, min(_round_up(tk, 128), _round_up(K, 128)))
        Kp = _round_up(K, tk)
        if Kp != K:
            x_op = jnp.pad(x_op, ((0, 0), (0, Kp - K)))
            fw_op = jnp.pad(fw_op, ((0, 0), (0, Kp - K)))
            w_op = jnp.pad(w_op, ((0, Kp - K), (0, 0)))
        out = pl.pallas_call(
            functools.partial(_tiled_kernel, precision=precision),
            out_shape=jax.ShapeDtypeStruct((Np, D), jnp.float32),
            grid=(Np // tm, Kp // tk),
            in_specs=[
                pl.BlockSpec((tm, tk), lambda i, k: (i, k)),   # x
                pl.BlockSpec((1, tk), lambda i, k: (0, k)),    # fixed_weights
                pl.BlockSpec((tk, D), lambda i, k: (k, 0)),    # W^T
                pl.BlockSpec((1, D), lambda i, k: (0, 0)),     # bias
                pl.BlockSpec((1, D), lambda i, k: (0, 0)),     # LN gamma
                pl.BlockSpec((1, D), lambda i, k: (0, 0)),     # LN beta
            ],
            out_specs=pl.BlockSpec((tm, D), lambda i, k: (i, 0)),
            compiler_params=pltpu.CompilerParams(
                dimension_semantics=("parallel", "arbitrary"),
                vmem_limit_bytes=vmem_limit),
        )(x_op, fw_op, w_op, b2, g2, beta2).astype(out_dtype)

    out = out[:N]
    if sequence_length is not None:
        # Lazy broadcast (N, D) -> (N, F, D); values identical to .repeat().
        out = jnp.broadcast_to(out[:, None, :], (N, sequence_length, D))
    return out


# ----------------------------------------------------------------------------
# pure-JAX reference (mirrors the PyTorch module)
# ----------------------------------------------------------------------------
def _reference(x, fw, w_t, b, g, beta, sequence_length=None):
    y = jnp.dot(x * fw, w_t, precision=jax.lax.Precision.HIGHEST) + b
    mean = y.mean(-1, keepdims=True)
    var = ((y - mean) ** 2).mean(-1, keepdims=True)
    y = (y - mean) / jnp.sqrt(var + LN_EPS)
    y = jnp.maximum(y * g + beta, 0.0)
    if sequence_length is not None:
        y = jnp.broadcast_to(y[:, None, :],
                             (x.shape[0], sequence_length, y.shape[-1]))
    return y


if __name__ == "__main__":
    # Small shapes consistent with the module (input_dim -> output_dim=128).
    N, K, D, F = 8, 512, 128, 4

    key = jax.random.PRNGKey(0)
    kx, kfw, kw, kb, kg, kbeta = jax.random.split(key, 6)

    x = jax.random.normal(kx, (N, K), dtype=jnp.float32)
    # fixed_weights default is ones in the module; use non-trivial values to
    # exercise the in-kernel elementwise-multiply path.
    fixed_weights = 0.5 + 0.5 * jax.random.uniform(kfw, (K,), dtype=jnp.float32)
    w_t = 0.05 * jax.random.normal(kw, (K, D), dtype=jnp.float32)   # Linear weight^T
    bias = 0.01 * jax.random.normal(kb, (D,), dtype=jnp.float32)
    gamma = 1.0 + 0.1 * jax.random.normal(kg, (D,), dtype=jnp.float32)
    beta = 0.1 * jax.random.normal(kbeta, (D,), dtype=jnp.float32)

    ref2d = _reference(x, fixed_weights, w_t, bias, gamma, beta)
    ref3d = _reference(x, fixed_weights, w_t, bias, gamma, beta,
                       sequence_length=F)

    # 1) f32-exact fused path (tight parity with the PyTorch reference).
    out_f32 = handcrafted_branch(x, fixed_weights, w_t, bias, gamma, beta,
                                 sequence_length=F, use_bf16=False)
    out_f32 = jax.block_until_ready(out_f32)
    assert out_f32.shape == (N, F, D)
    assert jnp.allclose(out_f32, ref3d, atol=1e-4, rtol=1e-4)

    # 2) Default path: bf16 MXU operands, f32 accumulate + f32 LN epilogue
    #    (documented tolerance change vs. the f32 reference).
    out_bf = handcrafted_branch(x, fixed_weights, w_t, bias, gamma, beta)
    out_bf = jax.block_until_ready(out_bf)
    assert out_bf.shape == (N, D)
    assert jnp.allclose(out_bf, ref2d, atol=5e-2, rtol=5e-2)

    # 3) K-tiled fallback (forced, small tk -> multiple k steps), f32 exact.
    out_t = handcrafted_branch(x, fixed_weights, w_t, bias, gamma, beta,
                               tk=128, force_tiled=True, use_bf16=False)
    out_t = jax.block_until_ready(out_t)
    assert out_t.shape == (N, D)
    assert jnp.allclose(out_t, ref2d, atol=1e-4, rtol=1e-4)

    print("KERNEL_OK")
</pallas_src>

<mosaic_0001>
module attributes {stable_mosaic.version = 11 : i64} {
  func.func @_fused_kernel(%arg0: i32, %arg1: memref<8x512xf32, #tpu.memory_space<vmem>>, %arg2: memref<1x512xf32, #tpu.memory_space<vmem>>, %arg3: memref<512x128xf32, #tpu.memory_space<vmem>>, %arg4: memref<1x128xf32, #tpu.memory_space<vmem>>, %arg5: memref<1x128xf32, #tpu.memory_space<vmem>>, %arg6: memref<1x128xf32, #tpu.memory_space<vmem>>, %arg7: memref<8x128xf32, #tpu.memory_space<vmem>>) attributes {dimension_semantics = [#tpu.dimension_semantics<parallel>], iteration_bounds = array<i64: 1>, scalar_prefetch = 0 : i64, scratch_operands = 0 : i64, tpu.core_type = #tpu.core_type<tc>, window_params = [{transform_indices = @transform_0, window_bounds = array<i64: 8, 512>}, {pipeline_mode = #tpu.pipeline_mode<synchronous>, transform_indices = @transform_1, window_bounds = array<i64: 1, 512>}, {pipeline_mode = #tpu.pipeline_mode<synchronous>, transform_indices = @transform_2, window_bounds = array<i64: 512, 128>}, {pipeline_mode = #tpu.pipeline_mode<synchronous>, transform_indices = @transform_3, window_bounds = array<i64: 1, 128>}, {pipeline_mode = #tpu.pipeline_mode<synchronous>, transform_indices = @transform_4, window_bounds = array<i64: 1, 128>}, {pipeline_mode = #tpu.pipeline_mode<synchronous>, transform_indices = @transform_5, window_bounds = array<i64: 1, 128>}, {transform_indices = @transform_6, window_bounds = array<i64: 8, 128>}]} {
    %c0 = arith.constant 0 : index
    %c0_0 = arith.constant 0 : index
    %0 = vector.load %arg1[%c0, %c0_0] : memref<8x512xf32, #tpu.memory_space<vmem>>, vector<8x512xf32>
    %c0_1 = arith.constant 0 : index
    %c0_2 = arith.constant 0 : index
    %1 = vector.load %arg2[%c0_1, %c0_2] : memref<1x512xf32, #tpu.memory_space<vmem>>, vector<1x512xf32>
    %2 = vector.broadcast %1 : vector<1x512xf32> to vector<8x512xf32>
    %3 = arith.mulf %0, %2 : vector<8x512xf32>
    %c0_3 = arith.constant 0 : index
    %c0_4 = arith.constant 0 : index
    %4 = vector.load %arg3[%c0_3, %c0_4] : memref<512x128xf32, #tpu.memory_space<vmem>>, vector<512x128xf32>
    %cst = arith.constant dense<0.000000e+00> : vector<8x128xf32>
    %5 = tpu.matmul %3, %4, %cst {dimension_numbers = #tpu.dot_dimension_numbers<[1], [0], [0], [1], [0, 0, 1, 1], [], []>, precision = #tpu.contract_precision<fp32>} : vector<8x512xf32>, vector<512x128xf32>, vector<8x128xf32> -> vector<8x128xf32>
    %c0_5 = arith.constant 0 : index
    %c0_6 = arith.constant 0 : index
    %6 = vector.load %arg4[%c0_5, %c0_6] : memref<1x128xf32, #tpu.memory_space<vmem>>, vector<1x128xf32>
    %7 = vector.broadcast %6 : vector<1x128xf32> to vector<8x128xf32>
    %8 = arith.addf %5, %7 : vector<8x128xf32>
    %c0_7 = arith.constant 0 : index
    %c0_8 = arith.constant 0 : index
    %9 = vector.load %arg5[%c0_7, %c0_8] : memref<1x128xf32, #tpu.memory_space<vmem>>, vector<1x128xf32>
    %c0_9 = arith.constant 0 : index
    %c0_10 = arith.constant 0 : index
    %10 = vector.load %arg6[%c0_9, %c0_10] : memref<1x128xf32, #tpu.memory_space<vmem>>, vector<1x128xf32>
    %cst_11 = arith.constant dense<0.000000e+00> : vector<8xf32>
    %11 = vector.multi_reduction <add>, %8, %cst_11 [1] : vector<8x128xf32> to vector<8xf32>
    %12 = vector.shape_cast %11 : vector<8xf32> to vector<8x1xf32>
    %cst_12 = arith.constant 1.280000e+02 : f32
    %13 = vector.broadcast %cst_12 : f32 to vector<8x1xf32>
    %14 = arith.divf %12, %13 : vector<8x1xf32>
    %15 = vector.broadcast %14 : vector<8x1xf32> to vector<8x128xf32>
    %16 = arith.subf %8, %15 : vector<8x128xf32>
    %17 = arith.mulf %16, %16 : vector<8x128xf32>
    %cst_13 = arith.constant dense<0.000000e+00> : vector<8xf32>
    %18 = vector.multi_reduction <add>, %17, %cst_13 [1] : vector<8x128xf32> to vector<8xf32>
    %19 = vector.shape_cast %18 : vector<8xf32> to vector<8x1xf32>
    %cst_14 = arith.constant 1.280000e+02 : f32
    %20 = vector.broadcast %cst_14 : f32 to vector<8x1xf32>
    %21 = arith.divf %19, %20 : vector<8x1xf32>
    %cst_15 = arith.constant 9.99999974E-6 : f32
    %22 = vector.broadcast %cst_15 : f32 to vector<8x1xf32>
    %23 = arith.addf %21, %22 : vector<8x1xf32>
    %24 = math.rsqrt %23 : vector<8x1xf32>
    %25 = vector.broadcast %24 : vector<8x1xf32> to vector<8x128xf32>
    %26 = arith.mulf %16, %25 : vector<8x128xf32>
    %27 = vector.broadcast %9 : vector<1x128xf32> to vector<8x128xf32>
    %28 = arith.mulf %26, %27 : vector<8x128xf32>
    %29 = vector.broadcast %10 : vector<1x128xf32> to vector<8x128xf32>
    %30 = arith.addf %28, %29 : vector<8x128xf32>
    %cst_16 = arith.constant 0.000000e+00 : f32
    %31 = vector.broadcast %cst_16 : f32 to vector<8x128xf32>
    %32 = arith.maximumf %30, %31 : vector<8x128xf32>
    %c0_17 = arith.constant 0 : index
    %c0_18 = arith.constant 0 : index
    %33 = vector.load %arg7[%c0_17, %c0_18] : memref<8x128xf32, #tpu.memory_space<vmem>>, vector<8x128xf32>
    tpu.vector_store %arg7[%c0_17, %c0_18], %32 {strides = array<i32>} : memref<8x128xf32, #tpu.memory_space<vmem>>, vector<8x128xf32>,
    return
  }
  func.func @transform_0(%arg0: i32) -> (i32, i32) {
    %c0_i32 = arith.constant 0 : i32
    %c0_i32_0 = arith.constant 0 : i32
    return %arg0, %c0_i32 : i32, i32
  }
  func.func @transform_1(%arg0: i32) -> (i32, i32) {
    %c0_i32 = arith.constant 0 : i32
    %c0_i32_0 = arith.constant 0 : i32
    %c0_i32_1 = arith.constant 0 : i32
    return %c0_i32, %c0_i32_0 : i32, i32
  }
  func.func @transform_2(%arg0: i32) -> (i32, i32) {
    %c0_i32 = arith.constant 0 : i32
    %c0_i32_0 = arith.constant 0 : i32
    %c0_i32_1 = arith.constant 0 : i32
    return %c0_i32, %c0_i32_0 : i32, i32
  }
  func.func @transform_3(%arg0: i32) -> (i32, i32) {
    %c0_i32 = arith.constant 0 : i32
    %c0_i32_0 = arith.constant 0 : i32
    %c0_i32_1 = arith.constant 0 : i32
    return %c0_i32, %c0_i32_0 : i32, i32
  }
  func.func @transform_4(%arg0: i32) -> (i32, i32) {
    %c0_i32 = arith.constant 0 : i32
    %c0_i32_0 = arith.constant 0 : i32
    %c0_i32_1 = arith.constant 0 : i32
    return %c0_i32, %c0_i32_0 : i32, i32
  }
  func.func @transform_5(%arg0: i32) -> (i32, i32) {
    %c0_i32 = arith.constant 0 : i32
    %c0_i32_0 = arith.constant 0 : i32
    %c0_i32_1 = arith.constant 0 : i32
    return %c0_i32, %c0_i32_0 : i32, i32
  }
  func.func @transform_6(%arg0: i32) -> (i32, i32) {
    %c0_i32 = arith.constant 0 : i32
    %c0_i32_0 = arith.constant 0 : i32
    return %arg0, %c0_i32 : i32, i32
  }
}

</mosaic_0001>

<llo_original>
// kernel: handcrafted_branch.1
$region0: #{handcrafted_branch.1}
  #allocation0 [shape = 'u32[]', space=smem, size = 0x4, offset = 0x4, fixed_abs, tag = 'smem constant byte address 0x4 - core index']
  #allocation1 [shape = 'u32[144,128]{1,0:T(1,128)}', space=vmem, size = 0x12000, scoped, tag = 'internal scratch']
  %s0 = inlined_call_operand.hbm [shape: f32[8,512], index: 0, kind: input, shape index: {}]
  %s1 = inlined_call_operand.vmem [shape: f32[1,512], index: 1, kind: input, shape index: {}]
  %s2 = inlined_call_operand.hbm [shape: f32[512,128], index: 2, kind: input, shape index: {}]
  %s3 = inlined_call_operand.vmem [shape: f32[1,128], index: 3, kind: input, shape index: {}]
  %s4 = inlined_call_operand.vmem [shape: f32[1,128], index: 4, kind: input, shape index: {}]
  %s5 = inlined_call_operand.vmem [shape: f32[1,128], index: 5, kind: input, shape index: {}]
  %s6 = inlined_call_operand.vmem [shape: f32[8,128], index: 6, kind: output, shape index: {}]
  %s7 = sld [smem:[#allocation0]]
  $region42: #{handcrafted_branch.1} parent=0
    _
  %s9 = ssub.s32 1, %s7
  %s10 = scalar_select 0, %s9, %s7
  $region1: #{handcrafted_branch.1} parent=0
    #allocation2 [shape = 'u8[16384]{0}', space=vmem, size = 0x4000, scoped, tag = 'input window, operand 0, single buffered']
    #allocation3 [shape = 's32[1]{0}', space=sflag, size = 0x4, scoped, tag = 'scoped memory for handcrafted_branch.1']
    #allocation4 [shape = 'u8[262144]{0}', space=vmem, size = 0x40000, scoped, tag = 'input window, operand 2, single buffered']
    #allocation5 [shape = 's32[1]{0}', space=sflag, size = 0x4, scoped, tag = 'scoped memory for handcrafted_branch.1']
    %11 = vsyncpa [#allocation3], 0
    %12 = vsyncpa [#allocation5], 0
    // Predicated region
    $region2: #{handcrafted_branch.1} parent=1 // pred_check
      _
    $region3: #{handcrafted_branch.1} parent=1 // pred_check_branch
      %14 = sbr.rel (0) target = $region5
    $region4: #{handcrafted_branch.1} parent=1 // pred_region
      %s16 = ssub.s32 512, 512
      %17 = vsyncadd [#allocation3], %s16
      %s19 = sshll.u32 [#allocation2], 4
      %s20 = int_to_ptr.vmem [resolvable:$true] %s19
      %22 = dma.hbm_to_vmem [thread:$0]  %s0, 512, %s20, [#allocation3]
    $region5: #{handcrafted_branch.1} parent=1 // pred_fallthru
      _
    // Predicated region
    $region6: #{handcrafted_branch.1} parent=1 // pred_check
      _
    $region7: #{handcrafted_branch.1} parent=1 // pred_check_branch
      %24 = sbr.rel (0) target = $region9
    $region8: #{handcrafted_branch.1} parent=1 // pred_region
      _
    $region9: #{handcrafted_branch.1} parent=1 // pred_fallthru
      _
    // Predicated region
    $region10: #{handcrafted_branch.1} parent=1 // pred_check
      _
    $region11: #{handcrafted_branch.1} parent=1 // pred_check_branch
      %26 = sbr.rel (0) target = $region13
    $region12: #{handcrafted_branch.1} parent=1 // pred_region
      %s28 = ssub.s32 8192, 8192
      %29 = vsyncadd [#allocation5], %s28
      %s30 = sshll.u32 [#allocation4], 4
      %s31 = int_to_ptr.vmem [resolvable:$true] %s30
      %36 = dma.hbm_to_vmem [thread:$0]  %s2, 8192, %s31, [#allocation5], 128, 128, 8
    $region13: #{handcrafted_branch.1} parent=1 // pred_fallthru
      _
    // Predicated region
    $region14: #{handcrafted_branch.1} parent=1 // pred_check
      _
    $region15: #{handcrafted_branch.1} parent=1 // pred_check_branch
      %38 = sbr.rel (0) target = $region17
    $region16: #{handcrafted_branch.1} parent=1 // pred_region
      _
    $region17: #{handcrafted_branch.1} parent=1 // pred_fallthru
      _
    // Predicated region
    $region18: #{handcrafted_branch.1} parent=1 // pred_check
      _
    $region19: #{handcrafted_branch.1} parent=1 // pred_check_branch
      %40 = sbr.rel (0) target = $region21
    $region20: #{handcrafted_branch.1} parent=1 // pred_region
      _
    $region21: #{handcrafted_branch.1} parent=1 // pred_fallthru
      _
    // Predicated region
    $region22: #{handcrafted_branch.1} parent=1 // pred_check
      _
    $region23: #{handcrafted_branch.1} parent=1 // pred_check_branch
      %42 = sbr.rel (0) target = $region25
    $region24: #{handcrafted_branch.1} parent=1 // pred_region
      _
    $region25: #{handcrafted_branch.1} parent=1 // pred_fallthru
      _
    // Predicated region
    $region26: #{handcrafted_branch.1} parent=1 // pred_check
      _
    $region27: #{handcrafted_branch.1} parent=1 // pred_check_branch
      %44 = sbr.rel (0) target = $region29
    $region28: #{handcrafted_branch.1} parent=1 // pred_region
      %45 = dma.done [#allocation3], 512
    $region29: #{handcrafted_branch.1} parent=1 // pred_fallthru
      _
    // Predicated region
    $region30: #{handcrafted_branch.1} parent=1 // pred_check
      _
    $region31: #{handcrafted_branch.1} parent=1 // pred_check_branch
      %47 = sbr.rel (0) target = $region33
    $region32: #{handcrafted_branch.1} parent=1 // pred_region
      %48 = dma.done [#allocation5], 8192
    $region33: #{handcrafted_branch.1} parent=1 // pred_fallthru
      _
    %v49 = vld [vmem:[#allocation2] sm:$0xff]
    %v50 = vld [vmem:[#allocation2 + $0x8] sm:$0xff]
    %v51 = vld [vmem:[#allocation2 + $0x10] sm:$0xff]
    %v52 = vld [vmem:[#allocation2 + $0x18] sm:$0xff]
    %v53 = vld [vmem:[%s1] sm:$0xf]
    %v55 = vlaneseq
    %v56 = vshrl.u32 %v55, 7
    %v57 = vsub.s32 0, %v56
    %v58 = vrot.slane %v53, %v57
    %v59 = vlaneseq
    %v60 = vshrl.u32 %v59, 7
    %v61 = vsub.s32 1, %v60
    %v62 = vrot.slane %v53, %v61
    %v63 = vlaneseq
    %v64 = vshrl.u32 %v63, 7
    %v65 = vsub.s32 2, %v64
    %v66 = vrot.slane %v53, %v65
    %v67 = vlaneseq
    %v68 = vshrl.u32 %v67, 7
    %v69 = vsub.s32 3, %v68
    %v70 = vrot.slane %v53, %v69
    %v75 = vmul.f32 %v49, %v58
    %v76 = vmul.f32 %v50, %v62
    %v77 = vmul.f32 %v51, %v66
    %v78 = vmul.f32 %v52, %v70
    %v79 = vld [vmem:[#allocation4] sm:$0xff]
    %v80 = vld [vmem:[#allocation4 + $0x8] sm:$0xff]
    %v81 = vld [vmem:[#allocation4 + $0x10] sm:$0xff]
    %v82 = vld [vmem:[#allocation4 + $0x18] sm:$0xff]
    %v83 = vld [vmem:[#allocation4 + $0x20] sm:$0xff]
    %v84 = vld [vmem:[#allocation4 + $0x28] sm:$0xff]
    %v85 = vld [vmem:[#allocation4 + $0x30] sm:$0xff]
    %v86 = vld [vmem:[#allocation4 + $0x38] sm:$0xff]
    %v87 = vld [vmem:[#allocation4 + $0x40] sm:$0xff]
    %v88 = vld [vmem:[#allocation4 + $0x48] sm:$0xff]
    %v89 = vld [vmem:[#allocation4 + $0x50] sm:$0xff]
    %v90 = vld [vmem:[#allocation4 + $0x58] sm:$0xff]
    %v91 = vld [vmem:[#allocation4 + $0x60] sm:$0xff]
    %v92 = vld [vmem:[#allocation4 + $0x68] sm:$0xff]
    %v93 = vld [vmem:[#allocation4 + $0x70] sm:$0xff]
    %v94 = vld [vmem:[#allocation4 + $0x78] sm:$0xff]
    %v95 = vld [vmem:[#allocation4 + $0x80] sm:$0xff]
    %v96 = vld [vmem:[#allocation4 + $0x88] sm:$0xff]
    %v97 = vld [vmem:[#allocation4 + $0x90] sm:$0xff]
    %v98 = vld [vmem:[#allocation4 + $0x98] sm:$0xff]
    %v99 = vld [vmem:[#allocation4 + $0xa0] sm:$0xff]
    %v100 = vld [vmem:[#allocation4 + $0xa8] sm:$0xff]
    %v101 = vld [vmem:[#allocation4 + $0xb0] sm:$0xff]
    %v102 = vld [vmem:[#allocation4 + $0xb8] sm:$0xff]
    %v103 = vld [vmem:[#allocation4 + $0xc0] sm:$0xff]
    %v104 = vld [vmem:[#allocation4 + $0xc8] sm:$0xff]
    %v105 = vld [vmem:[#allocation4 + $0xd0] sm:$0xff]
    %v106 = vld [vmem:[#allocation4 + $0xd8] sm:$0xff]
    %v107 = vld [vmem:[#allocation4 + $0xe0] sm:$0xff]
    %v108 = vld [vmem:[#allocation4 + $0xe8] sm:$0xff]
    %v109 = vld [vmem:[#allocation4 + $0xf0] sm:$0xff]
    %v110 = vld [vmem:[#allocation4 + $0xf8] sm:$0xff]
    %v111 = vld [vmem:[#allocation4 + $0x100] sm:$0xff]
    %v112 = vld [vmem:[#allocation4 + $0x108] sm:$0xff]
    %v113 = vld [vmem:[#allocation4 + $0x110] sm:$0xff]
    %v114 = vld [vmem:[#allocation4 + $0x118] sm:$0xff]
    %v115 = vld [vmem:[#allocation4 + $0x120] sm:$0xff]
    %v116 = vld [vmem:[#allocation4 + $0x128] sm:$0xff]
    %v117 = vld [vmem:[#allocation4 + $0x130] sm:$0xff]
    %v118 = vld [vmem:[#allocation4 + $0x138] sm:$0xff]
    %v119 = vld [vmem:[#allocation4 + $0x140] sm:$0xff]
    %v120 = vld [vmem:[#allocation4 + $0x148] sm:$0xff]
    %v121 = vld [vmem:[#allocation4 + $0x150] sm:$0xff]
    %v122 = vld [vmem:[#allocation4 + $0x158] sm:$0xff]
    %v123 = vld [vmem:[#allocation4 + $0x160] sm:$0xff]
    %v124 = vld [vmem:[#allocation4 + $0x168] sm:$0xff]
    %v125 = vld [vmem:[#allocation4 + $0x170] sm:$0xff]
    %v126 = vld [vmem:[#allocation4 + $0x178] sm:$0xff]
    %v127 = vld [vmem:[#allocation4 + $0x180] sm:$0xff]
    %v128 = vld [vmem:[#allocation4 + $0x188] sm:$0xff]
    %v129 = vld [vmem:[#allocation4 + $0x190] sm:$0xff]
    %v130 = vld [vmem:[#allocation4 + $0x198] sm:$0xff]
    %v131 = vld [vmem:[#allocation4 + $0x1a0] sm:$0xff]
    %v132 = vld [vmem:[#allocation4 + $0x1a8] sm:$0xff]
    %v133 = vld [vmem:[#allocation4 + $0x1b0] sm:$0xff]
    %v134 = vld [vmem:[#allocation4 + $0x1b8] sm:$0xff]
    %v135 = vld [vmem:[#allocation4 + $0x1c0] sm:$0xff]
    %v136 = vld [vmem:[#allocation4 + $0x1c8] sm:$0xff]
    %v137 = vld [vmem:[#allocation4 + $0x1d0] sm:$0xff]
    %v138 = vld [vmem:[#allocation4 + $0x1d8] sm:$0xff]
    %v139 = vld [vmem:[#allocation4 + $0x1e0] sm:$0xff]
    %v140 = vld [vmem:[#allocation4 + $0x1e8] sm:$0xff]
    %v141 = vld [vmem:[#allocation4 + $0x1f0] sm:$0xff]
    %v142 = vld [vmem:[#allocation4 + $0x1f8] sm:$0xff]
    %v143 = vld [vmem:[%s3] sm:$0x1]
    %v145 = vlaneseq
    %v146 = vshrl.u32 %v145, 7
    %v147 = vsub.s32 0, %v146
    %v148 = vrot.slane %v143, %v147
    %150 = vmatprep.subr.mxu0 0.0
    %v151 = vand.u32 %v79, 4294901760
    %152 = vmatpush1.msra.mxu0 %v151
    %153 = vmatprep.subr.mxu0 0.0
    %v154 = vand.u32 %v80, 4294901760
    %155 = vmatpush1.msra.mxu0 %v154
    %156 = vmatprep.subr.mxu0 0.0
    %v157 = vand.u32 %v81, 4294901760
    %158 = vmatpush1.msra.mxu0 %v157
    %159 = vmatprep.subr.mxu0 0.0
    %v160 = vand.u32 %v82, 4294901760
    %161 = vmatpush1.msra.mxu0 %v160
    %162 = vmatprep.subr.mxu0 0.0
    %v163 = vand.u32 %v83, 4294901760
    %164 = vmatpush1.msra.mxu0 %v163
    %165 = vmatprep.subr.mxu0 0.0
    %v166 = vand.u32 %v84, 4294901760
    %167 = vmatpush1.msra.mxu0 %v166
    %168 = vmatprep.subr.mxu0 0.0
    %v169 = vand.u32 %v85, 4294901760
    %170 = vmatpush1.msra.mxu0 %v169
    %171 = vmatprep.subr.mxu0 0.0
    %v172 = vand.u32 %v86, 4294901760
    %173 = vmatpush1.msra.mxu0 %v172
    %174 = vmatprep.subr.mxu0 0.0
    %v175 = vand.u32 %v87, 4294901760
    %176 = vmatpush1.msra.mxu0 %v175
    %177 = vmatprep.subr.mxu0 0.0
    %v178 = vand.u32 %v88, 4294901760
    %179 = vmatpush1.msra.mxu0 %v178
    %180 = vmatprep.subr.mxu0 0.0
    %v181 = vand.u32 %v89, 4294901760
    %182 = vmatpush1.msra.mxu0 %v181
    %183 = vmatprep.subr.mxu0 0.0
    %v184 = vand.u32 %v90, 4294901760
    %185 = vmatpush1.msra.mxu0 %v184
    %186 = vmatprep.subr.mxu0 0.0
    %v187 = vand.u32 %v91, 4294901760
    %188 = vmatpush1.msra.mxu0 %v187
    %189 = vmatprep.subr.mxu0 0.0
    %v190 = vand.u32 %v92, 4294901760
    %191 = vmatpush1.msra.mxu0 %v190
    %192 = vmatprep.subr.mxu0 0.0
    %v193 = vand.u32 %v93, 4294901760
    %194 = vmatpush1.msra.mxu0 %v193
    %195 = vmatprep.subr.mxu0 0.0
    %v196 = vand.u32 %v94, 4294901760
    %197 = vmatpush1.msra.mxu0 %v196
    %198 = vmatprep.subr.mxu0 0.0
    %v199 = vand.u32 %v95, 4294901760
    %200 = vmatpush1.msra.mxu0 %v199
    %201 = vmatprep.subr.mxu0 0.0
    %v202 = vand.u32 %v96, 4294901760
    %203 = vmatpush1.msra.mxu0 %v202
    %204 = vmatprep.subr.mxu0 0.0
    %v205 = vand.u32 %v97, 4294901760
    %206 = vmatpush1.msra.mxu0 %v205
    %207 = vmatprep.subr.mxu0 0.0
    %v208 = vand.u32 %v98, 4294901760
    %209 = vmatpush1.msra.mxu0 %v208
    %210 = vmatprep.subr.mxu0 0.0
    %v211 = vand.u32 %v99, 4294901760
    %212 = vmatpush1.msra.mxu0 %v211
    %213 = vmatprep.subr.mxu0 0.0
    %v214 = vand.u32 %v100, 4294901760
    %215 = vmatpush1.msra.mxu0 %v214
    %216 = vmatprep.subr.mxu0 0.0
    %v217 = vand.u32 %v101, 4294901760
    %218 = vmatpush1.msra.mxu0 %v217
    %219 = vmatprep.subr.mxu0 0.0
    %v220 = vand.u32 %v102, 4294901760
    %221 = vmatpush1.msra.mxu0 %v220
    %222 = vmatprep.subr.mxu0 0.0
    %v223 = vand.u32 %v103, 4294901760
    %224 = vmatpush1.msra.mxu0 %v223
    %225 = vmatprep.subr.mxu0 0.0
    %v226 = vand.u32 %v104, 4294901760
    %227 = vmatpush1.msra.mxu0 %v226
    %228 = vmatprep.subr.mxu0 0.0
    %v229 = vand.u32 %v105, 4294901760
    %230 = vmatpush1.msra.mxu0 %v229
    %231 = vmatprep.subr.mxu0 0.0
    %v232 = vand.u32 %v106, 4294901760
    %233 = vmatpush1.msra.mxu0 %v232
    %234 = vmatprep.subr.mxu0 0.0
    %v235 = vand.u32 %v107, 4294901760
    %236 = vmatpush1.msra.mxu0 %v235
    %237 = vmatprep.subr.mxu0 0.0
    %v238 = vand.u32 %v108, 4294901760
    %239 = vmatpush1.msra.mxu0 %v238
    %240 = vmatprep.subr.mxu0 0.0
    %v241 = vand.u32 %v109, 4294901760
    %242 = vmatpush1.msra.mxu0 %v241
    %243 = vmatprep.subr.mxu0 0.0
    %v244 = vand.u32 %v110, 4294901760
    %245 = vmatpush1.msra.mxu0 %v244
    %v246 = vand.u32 %v76, 4294901760
    %v247 = vsub.f32 %v76, %v246
    %v248 = vand.u32 %v247, 4294901760
    %v249 = vsub.f32 %v247, %v248
    %v250 = vand.u32 %v249, 4294901760
    %251 = vmatprep.mubr.f32.mxu0 %v250
    %v252 = vand.u32 %v75, 4294901760
    %v253 = vsub.f32 %v75, %v252
    %v254 = vand.u32 %v253, 4294901760
    %v255 = vsub.f32 %v253, %v254
    %v256 = vand.u32 %v255, 4294901760
    %257 = vmatmul.mubr.f32.gmra.mrb[0].mxu0 %v256
    %v258 = vpop.f32.mrb[0].mxu0
    %v259 = vadd.f32 %v148, %v258
    %v260 = vpop.f32.mrb[0].mxu0
    %261 = vdwg.mxu0
    %262 = vmatprep.subr.mxu0 0.0
    %v263 = vand.u32 %v79, 4294901760
    %v264 = vsub.f32 %v79, %v263
    %v265 = vand.u32 %v264, 4294901760
    %v266 = vsub.f32 %v264, %v265
    %v267 = vand.u32 %v266, 4294901760
    %268 = vmatpush1.msra.mxu0 %v267
    %269 = vmatprep.subr.mxu0 0.0
    %v270 = vand.u32 %v80, 4294901760
    %v271 = vsub.f32 %v80, %v270
    %v272 = vand.u32 %v271, 4294901760
    %v273 = vsub.f32 %v271, %v272
    %v274 = vand.u32 %v273, 4294901760
    %275 = vmatpush1.msra.mxu0 %v274
    %276 = vmatprep.subr.mxu0 0.0
    %v277 = vand.u32 %v81, 4294901760
    %v278 = vsub.f32 %v81, %v277
    %v279 = vand.u32 %v278, 4294901760
    %v280 = vsub.f32 %v278, %v279
    %v281 = vand.u32 %v280, 4294901760
    %282 = vmatpush1.msra.mxu0 %v281
    %283 = vmatprep.subr.mxu0 0.0
    %v284 = vand.u32 %v82, 4294901760
    %v285 = vsub.f32 %v82, %v284
    %v286 = vand.u32 %v285, 4294901760
    %v287 = vsub.f32 %v285, %v286
    %v288 = vand.u32 %v287, 4294901760
    %289 = vmatpush1.msra.mxu0 %v288
    %290 = vmatprep.subr.mxu0 0.0
    %v291 = vand.u32 %v83, 4294901760
    %v292 = vsub.f32 %v83, %v291
    %v293 = vand.u32 %v292, 4294901760
    %v294 = vsub.f32 %v292, %v293
    %v295 = vand.u32 %v294, 4294901760
    %296 = vmatpush1.msra.mxu0 %v295
    %297 = vmatprep.subr.mxu0 0.0
    %v298 = vand.u32 %v84, 4294901760
    %v299 = vsub.f32 %v84, %v298
    %v300 = vand.u32 %v299, 4294901760
    %v301 = vsub.f32 %v299, %v300
    %v302 = vand.u32 %v301, 4294901760
    %303 = vmatpush1.msra.mxu0 %v302
    %304 = vmatprep.subr.mxu0 0.0
    %v305 = vand.u32 %v85, 4294901760
    %v306 = vsub.f32 %v85, %v305
    %v307 = vand.u32 %v306, 4294901760
    %v308 = vsub.f32 %v306, %v307
    %v309 = vand.u32 %v308, 4294901760
    %310 = vmatpush1.msra.mxu0 %v309
    %311 = vmatprep.subr.mxu0 0.0
    %v312 = vand.u32 %v86, 4294901760
    %v313 = vsub.f32 %v86, %v312
    %v314 = vand.u32 %v313, 4294901760
    %v315 = vsub.f32 %v313, %v314
    %v316 = vand.u32 %v315, 4294901760
    %317 = vmatpush1.msra.mxu0 %v316
    %318 = vmatprep.subr.mxu0 0.0
    %v319 = vand.u32 %v87, 4294901760
    %v320 = vsub.f32 %v87, %v319
    %v321 = vand.u32 %v320, 4294901760
    %v322 = vsub.f32 %v320, %v321
    %v323 = vand.u32 %v322, 4294901760
    %324 = vmatpush1.msra.mxu0 %v323
    %325 = vmatprep.subr.mxu0 0.0
    %v326 = vand.u32 %v88, 4294901760
    %v327 = vsub.f32 %v88, %v326
    %v328 = vand.u32 %v327, 4294901760
    %v329 = vsub.f32 %v327, %v328
    %v330 = vand.u32 %v329, 4294901760
    %331 = vmatpush1.msra.mxu0 %v330
    %332 = vmatprep.subr.mxu0 0.0
    %v333 = vand.u32 %v89, 4294901760
    %v334 = vsub.f32 %v89, %v333
    %v335 = vand.u32 %v334, 4294901760
    %v336 = vsub.f32 %v334, %v335
    %v337 = vand.u32 %v336, 4294901760
    %338 = vmatpush1.msra.mxu0 %v337
    %339 = vmatprep.subr.mxu0 0.0
    %v340 = vand.u32 %v90, 4294901760
    %v341 = vsub.f32 %v90, %v340
    %v342 = vand.u32 %v341, 4294901760
    %v343 = vsub.f32 %v341, %v342
    %v344 = vand.u32 %v343, 4294901760
    %345 = vmatpush1.msra.mxu0 %v344
    %346 = vmatprep.subr.mxu0 0.0
    %v347 = vand.u32 %v91, 4294901760
    %v348 = vsub.f32 %v91, %v347
    %v349 = vand.u32 %v348, 4294901760
    %v350 = vsub.f32 %v348, %v349
    %v351 = vand.u32 %v350, 4294901760
    %352 = vmatpush1.msra.mxu0 %v351
    %353 = vmatprep.subr.mxu0 0.0
    %v354 = vand.u32 %v92, 4294901760
    %v355 = vsub.f32 %v92, %v354
    %v356 = vand.u32 %v355, 4294901760
    %v357 = vsub.f32 %v355, %v356
    %v358 = vand.u32 %v357, 4294901760
    %359 = vmatpush1.msra.mxu0 %v358
    %360 = vmatprep.subr.mxu0 0.0
    %v361 = vand.u32 %v93, 4294901760
    %v362 = vsub.f32 %v93, %v361
    %v363 = vand.u32 %v362, 4294901760
    %v364 = vsub.f32 %v362, %v363
    %v365 = vand.u32 %v364, 4294901760
    %366 = vmatpush1.msra.mxu0 %v365
    %367 = vmatprep.subr.mxu0 0.0
    %v368 = vand.u32 %v94, 4294901760
    %v369 = vsub.f32 %v94, %v368
    %v370 = vand.u32 %v369, 4294901760
    %v371 = vsub.f32 %v369, %v370
    %v372 = vand.u32 %v371, 4294901760
    %373 = vmatpush1.msra.mxu0 %v372
    %374 = vmatprep.subr.mxu0 0.0
    %v375 = vand.u32 %v95, 4294901760
    %v376 = vsub.f32 %v95, %v375
    %v377 = vand.u32 %v376, 4294901760
    %v378 = vsub.f32 %v376, %v377
    %v379 = vand.u32 %v378, 4294901760
    %380 = vmatpush1.msra.mxu0 %v379
    %381 = vmatprep.subr.mxu0 0.0
    %v382 = vand.u32 %v96, 4294901760
    %v383 = vsub.f32 %v96, %v382
    %v384 = vand.u32 %v383, 4294901760
    %v385 = vsub.f32 %v383, %v384
    %v386 = vand.u32 %v385, 4294901760
    %387 = vmatpush1.msra.mxu0 %v386
    %388 = vmatprep.subr.mxu0 0.0
    %v389 = vand.u32 %v97, 4294901760
    %v390 = vsub.f32 %v97, %v389
    %v391 = vand.u32 %v390, 4294901760
    %v392 = vsub.f32 %v390, %v391
    %v393 = vand.u32 %v392, 4294901760
    %394 = vmatpush1.msra.mxu0 %v393
    %395 = vmatprep.subr.mxu0 0.0
    %v396 = vand.u32 %v98, 4294901760
    %v397 = vsub.f32 %v98, %v396
    %v398 = vand.u32 %v397, 4294901760
    %v399 = vsub.f32 %v397, %v398
    %v400 = vand.u32 %v399, 4294901760
    %401 = vmatpush1.msra.mxu0 %v400
    %402 = vmatprep.subr.mxu0 0.0
    %v403 = vand.u32 %v99, 4294901760
    %v404 = vsub.f32 %v99, %v403
    %v405 = vand.u32 %v404, 4294901760
    %v406 = vsub.f32 %v404, %v405
    %v407 = vand.u32 %v406, 4294901760
    %408 = vmatpush1.msra.mxu0 %v407
    %409 = vmatprep.subr.mxu0 0.0
    %v410 = vand.u32 %v100, 4294901760
    %v411 = vsub.f32 %v100, %v410
    %v412 = vand.u32 %v411, 4294901760
    %v413 = vsub.f32 %v411, %v412
    %v414 = vand.u32 %v413, 4294901760
    %415 = vmatpush1.msra.mxu0 %v414
    %416 = vmatprep.subr.mxu0 0.0
    %v417 = vand.u32 %v101, 4294901760
    %v418 = vsub.f32 %v101, %v417
    %v419 = vand.u32 %v418, 4294901760
    %v420 = vsub.f32 %v418, %v419
    %v421 = vand.u32 %v420, 4294901760
    %422 = vmatpush1.msra.mxu0 %v421
    %423 = vmatprep.subr.mxu0 0.0
    %v424 = vand.u32 %v102, 4294901760
    %v425 = vsub.f32 %v102, %v424
    %v426 = vand.u32 %v425, 4294901760
    %v427 = vsub.f32 %v425, %v426
    %v428 = vand.u32 %v427, 4294901760
    %429 = vmatpush1.msra.mxu0 %v428
    %430 = vmatprep.subr.mxu0 0.0
    %v431 = vand.u32 %v103, 4294901760
    %v432 = vsub.f32 %v103, %v431
    %v433 = vand.u32 %v432, 4294901760
    %v434 = vsub.f32 %v432, %v433
    %v435 = vand.u32 %v434, 4294901760
    %436 = vmatpush1.msra.mxu0 %v435
    %437 = vmatprep.subr.mxu0 0.0
    %v438 = vand.u32 %v104, 4294901760
    %v439 = vsub.f32 %v104, %v438
    %v440 = vand.u32 %v439, 4294901760
    %v441 = vsub.f32 %v439, %v440
    %v442 = vand.u32 %v441, 4294901760
    %443 = vmatpush1.msra.mxu0 %v442
    %444 = vmatprep.subr.mxu0 0.0
    %v445 = vand.u32 %v105, 4294901760
    %v446 = vsub.f32 %v105, %v445
    %v447 = vand.u32 %v446, 4294901760
    %v448 = vsub.f32 %v446, %v447
    %v449 = vand.u32 %v448, 4294901760
    %450 = vmatpush1.msra.mxu0 %v449
    %451 = vmatprep.subr.mxu0 0.0
    %v452 = vand.u32 %v106, 4294901760
    %v453 = vsub.f32 %v106, %v452
    %v454 = vand.u32 %v453, 4294901760
    %v455 = vsub.f32 %v453, %v454
    %v456 = vand.u32 %v455, 4294901760
    %457 = vmatpush1.msra.mxu0 %v456
    %458 = vmatprep.subr.mxu0 0.0
    %v459 = vand.u32 %v107, 4294901760
    %v460 = vsub.f32 %v107, %v459
    %v461 = vand.u32 %v460, 4294901760
    %v462 = vsub.f32 %v460, %v461
    %v463 = vand.u32 %v462, 4294901760
    %464 = vmatpush1.msra.mxu0 %v463
    %465 = vmatprep.subr.mxu0 0.0
    %v466 = vand.u32 %v108, 4294901760
    %v467 = vsub.f32 %v108, %v466
    %v468 = vand.u32 %v467, 4294901760
    %v469 = vsub.f32 %v467, %v468
    %v470 = vand.u32 %v469, 4294901760
    %471 = vmatpush1.msra.mxu0 %v470
    %472 = vmatprep.subr.mxu0 0.0
    %v473 = vand.u32 %v109, 4294901760
    %v474 = vsub.f32 %v109, %v473
    %v475 = vand.u32 %v474, 4294901760
    %v476 = vsub.f32 %v474, %v475
    %v477 = vand.u32 %v476, 4294901760
    %478 = vmatpush1.msra.mxu0 %v477
    %479 = vmatprep.subr.mxu0 0.0
    %v480 = vand.u32 %v110, 4294901760
    %v481 = vsub.f32 %v110, %v480
    %v482 = vand.u32 %v481, 4294901760
    %v483 = vsub.f32 %v481, %v482
    %v484 = vand.u32 %v483, 4294901760
    %485 = vmatpush1.msra.mxu0 %v484
    %v486 = vand.u32 %v76, 4294901760
    %487 = vmatprep.mubr.f32.mxu0 %v486
    %v488 = vand.u32 %v75, 4294901760
    %489 = vmatmul.mubr.f32.gmra.mrb[0].mxu0 %v488
    %v490 = vpop.f32.mrb[0].mxu0
    %v491 = vadd.f32 %v259, %v490
    %v492 = vpop.f32.mrb[0].mxu0
    %493 = vdwg.mxu0
    %494 = vmatprep.subr.mxu0 0.0
    %v495 = vand.u32 %v79, 4294901760
    %v496 = vsub.f32 %v79, %v495
    %497 = vmatpush1.msra.mxu0 %v496
    %498 = vmatprep.subr.mxu0 0.0
    %v499 = vand.u32 %v80, 4294901760
    %v500 = vsub.f32 %v80, %v499
    %501 = vmatpush1.msra.mxu0 %v500
    %502 = vmatprep.subr.mxu0 0.0
    %v503 = vand.u32 %v81, 4294901760
    %v504 = vsub.f32 %v81, %v503
    %505 = vmatpush1.msra.mxu0 %v504
    %506 = vmatprep.subr.mxu0 0.0
    %v507 = vand.u32 %v82, 4294901760
    %v508 = vsub.f32 %v82, %v507
    %509 = vmatpush1.msra.mxu0 %v508
    %510 = vmatprep.subr.mxu0 0.0
    %v511 = vand.u32 %v83, 4294901760
    %v512 = vsub.f32 %v83, %v511
    %513 = vmatpush1.msra.mxu0 %v512
    %514 = vmatprep.subr.mxu0 0.0
    %v515 = vand.u32 %v84, 4294901760
    %v516 = vsub.f32 %v84, %v515
    %517 = vmatpush1.msra.mxu0 %v516
    %518 = vmatprep.subr.mxu0 0.0
    %v519 = vand.u32 %v85, 4294901760
    %v520 = vsub.f32 %v85, %v519
    %521 = vmatpush1.msra.mxu0 %v520
    %522 = vmatprep.subr.mxu0 0.0
    %v523 = vand.u32 %v86, 4294901760
    %v524 = vsub.f32 %v86, %v523
    %525 = vmatpush1.msra.mxu0 %v524
    %526 = vmatprep.subr.mxu0 0.0
    %v527 = vand.u32 %v87, 4294901760
    %v528 = vsub.f32 %v87, %v527
    %529 = vmatpush1.msra.mxu0 %v528
    %530 = vmatprep.subr.mxu0 0.0
    %v531 = vand.u32 %v88, 4294901760
    %v532 = vsub.f32 %v88, %v531
    %533 = vmatpush1.msra.mxu0 %v532
    %534 = vmatprep.subr.mxu0 0.0
    %v535 = vand.u32 %v89, 4294901760
    %v536 = vsub.f32 %v89, %v535
    %537 = vmatpush1.msra.mxu0 %v536
    %538 = vmatprep.subr.mxu0 0.0
    %v539 = vand.u32 %v90, 4294901760
    %v540 = vsub.f32 %v90, %v539
    %541 = vmatpush1.msra.mxu0 %v540
    %542 = vmatprep.subr.mxu0 0.0
    %v543 = vand.u32 %v91, 4294901760
    %v544 = vsub.f32 %v91, %v543
    %545 = vmatpush1.msra.mxu0 %v544
    %546 = vmatprep.subr.mxu0 0.0
    %v547 = vand.u32 %v92, 4294901760
    %v548 = vsub.f32 %v92, %v547
    %549 = vmatpush1.msra.mxu0 %v548
    %550 = vmatprep.subr.mxu0 0.0
    %v551 = vand.u32 %v93, 4294901760
    %v552 = vsub.f32 %v93, %v551
    %553 = vmatpush1.msra.mxu0 %v552
    %554 = vmatprep.subr.mxu0 0.0
    %v555 = vand.u32 %v94, 4294901760
    %v556 = vsub.f32 %v94, %v555
    %557 = vmatpush1.msra.mxu0 %v556
    %558 = vmatprep.subr.mxu0 0.0
    %v559 = vand.u32 %v95, 4294901760
    %v560 = vsub.f32 %v95, %v559
    %561 = vmatpush1.msra.mxu0 %v560
    %562 = vmatprep.subr.mxu0 0.0
    %v563 = vand.u32 %v96, 4294901760
    %v564 = vsub.f32 %v96, %v563
    %565 = vmatpush1.msra.mxu0 %v564
    %566 = vmatprep.subr.mxu0 0.0
    %v567 = vand.u32 %v97, 4294901760
    %v568 = vsub.f32 %v97, %v567
    %569 = vmatpush1.msra.mxu0 %v568
    %570 = vmatprep.subr.mxu0 0.0
    %v571 = vand.u32 %v98, 4294901760
    %v572 = vsub.f32 %v98, %v571
    %573 = vmatpush1.msra.mxu0 %v572
    %574 = vmatprep.subr.mxu0 0.0
    %v575 = vand.u32 %v99, 4294901760
    %v576 = vsub.f32 %v99, %v575
    %577 = vmatpush1.msra.mxu0 %v576
    %578 = vmatprep.subr.mxu0 0.0
    %v579 = vand.u32 %v100, 4294901760
    %v580 = vsub.f32 %v100, %v579
    %581 = vmatpush1.msra.mxu0 %v580
    %582 = vmatprep.subr.mxu0 0.0
    %v583 = vand.u32 %v101, 4294901760
    %v584 = vsub.f32 %v101, %v583
    %585 = vmatpush1.msra.mxu0 %v584
    %586 = vmatprep.subr.mxu0 0.0
    %v587 = vand.u32 %v102, 4294901760
    %v588 = vsub.f32 %v102, %v587
    %589 = vmatpush1.msra.mxu0 %v588
    %590 = vmatprep.subr.mxu0 0.0
    %v591 = vand.u32 %v103, 4294901760
    %v592 = vsub.f32 %v103, %v591
    %593 = vmatpush1.msra.mxu0 %v592
    %594 = vmatprep.subr.mxu0 0.0
    %v595 = vand.u32 %v104, 4294901760
    %v596 = vsub.f32 %v104, %v595
    %597 = vmatpush1.msra.mxu0 %v596
    %598 = vmatprep.subr.mxu0 0.0
    %v599 = vand.u32 %v105, 4294901760
    %v600 = vsub.f32 %v105, %v599
    %601 = vmatpush1.msra.mxu0 %v600
    %602 = vmatprep.subr.mxu0 0.0
    %v603 = vand.u32 %v106, 4294901760
    %v604 = vsub.f32 %v106, %v603
    %605 = vmatpush1.msra.mxu0 %v604
    %606 = vmatprep.subr.mxu0 0.0
    %v607 = vand.u32 %v107, 4294901760
    %v608 = vsub.f32 %v107, %v607
    %609 = vmatpush1.msra.mxu0 %v608
    %610 = vmatprep.subr.mxu0 0.0
    %v611 = vand.u32 %v108, 4294901760
    %v612 = vsub.f32 %v108, %v611
    %613 = vmatpush1.msra.mxu0 %v612
    %614 = vmatprep.subr.mxu0 0.0
    %v615 = vand.u32 %v109, 4294901760
    %v616 = vsub.f32 %v109, %v615
    %617 = vmatpush1.msra.mxu0 %v616
    %618 = vmatprep.subr.mxu0 0.0
    %v619 = vand.u32 %v110, 4294901760
    %v620 = vsub.f32 %v110, %v619
    %621 = vmatpush1.msra.mxu0 %v620
    %v622 = vand.u32 %v76, 4294901760
    %v623 = vsub.f32 %v76, %v622
    %624 = vmatprep.mubr.f32.mxu0 %v623
    %v625 = vand.u32 %v75, 4294901760
    %v626 = vsub.f32 %v75, %v625
    %627 = vmatmul.mubr.f32.gmra.mrb[0].mxu0 %v626
    %v628 = vpop.f32.mrb[0].mxu0
    %v629 = vadd.f32 %v491, %v628
    %v630 = vpop.f32.mrb[0].mxu0
    %631 = vdwg.mxu0
    %632 = vmatprep.subr.mxu0 0.0
    %v633 = vand.u32 %v79, 4294901760
    %634 = vmatpush1.msra.mxu0 %v633
    %635 = vmatprep.subr.mxu0 0.0
    %v636 = vand.u32 %v80, 4294901760
    %637 = vmatpush1.msra.mxu0 %v636
    %638 = vmatprep.subr.mxu0 0.0
    %v639 = vand.u32 %v81, 4294901760
    %640 = vmatpush1.msra.mxu0 %v639
    %641 = vmatprep.subr.mxu0 0.0
    %v642 = vand.u32 %v82, 4294901760
    %643 = vmatpush1.msra.mxu0 %v642
    %644 = vmatprep.subr.mxu0 0.0
    %v645 = vand.u32 %v83, 4294901760
    %646 = vmatpush1.msra.mxu0 %v645
    %647 = vmatprep.subr.mxu0 0.0
    %v648 = vand.u32 %v84, 4294901760
    %649 = vmatpush1.msra.mxu0 %v648
    %650 = vmatprep.subr.mxu0 0.0
    %v651 = vand.u32 %v85, 4294901760
    %652 = vmatpush1.msra.mxu0 %v651
    %653 = vmatprep.subr.mxu0 0.0
    %v654 = vand.u32 %v86, 4294901760
    %655 = vmatpush1.msra.mxu0 %v654
    %656 = vmatprep.subr.mxu0 0.0
    %v657 = vand.u32 %v87, 4294901760
    %658 = vmatpush1.msra.mxu0 %v657
    %659 = vmatprep.subr.mxu0 0.0
    %v660 = vand.u32 %v88, 4294901760
    %661 = vmatpush1.msra.mxu0 %v660
    %662 = vmatprep.subr.mxu0 0.0
    %v663 = vand.u32 %v89, 4294901760
    %664 = vmatpush1.msra.mxu0 %v663
    %665 = vmatprep.subr.mxu0 0.0
    %v666 = vand.u32 %v90, 4294901760
    %667 = vmatpush1.msra.mxu0 %v666
    %668 = vmatprep.subr.mxu0 0.0
    %v669 = vand.u32 %v91, 4294901760
    %670 = vmatpush1.msra.mxu0 %v669
    %671 = vmatprep.subr.mxu0 0.0
    %v672 = vand.u32 %v92, 4294901760
    %673 = vmatpush1.msra.mxu0 %v672
    %674 = vmatprep.subr.mxu0 0.0
    %v675 = vand.u32 %v93, 4294901760
    %676 = vmatpush1.msra.mxu0 %v675
    %677 = vmatprep.subr.mxu0 0.0
    %v678 = vand.u32 %v94, 4294901760
    %679 = vmatpush1.msra.mxu0 %v678
    %680 = vmatprep.subr.mxu0 0.0
    %v681 = vand.u32 %v95, 4294901760
    %682 = vmatpush1.msra.mxu0 %v681
    %683 = vmatprep.subr.mxu0 0.0
    %v684 = vand.u32 %v96, 4294901760
    %685 = vmatpush1.msra.mxu0 %v684
    %686 = vmatprep.subr.mxu0 0.0
    %v687 = vand.u32 %v97, 4294901760
    %688 = vmatpush1.msra.mxu0 %v687
    %689 = vmatprep.subr.mxu0 0.0
    %v690 = vand.u32 %v98, 4294901760
    %691 = vmatpush1.msra.mxu0 %v690
    %692 = vmatprep.subr.mxu0 0.0
    %v693 = vand.u32 %v99, 4294901760
    %694 = vmatpush1.msra.mxu0 %v693
    %695 = vmatprep.subr.mxu0 0.0
    %v696 = vand.u32 %v100, 4294901760
    %697 = vmatpush1.msra.mxu0 %v696
    %698 = vmatprep.subr.mxu0 0.0
    %v699 = vand.u32 %v101, 4294901760
    %700 = vmatpush1.msra.mxu0 %v699
    %701 = vmatprep.subr.mxu0 0.0
    %v702 = vand.u32 %v102, 4294901760
    %703 = vmatpush1.msra.mxu0 %v702
    %704 = vmatprep.subr.mxu0 0.0
    %v705 = vand.u32 %v103, 4294901760
    %706 = vmatpush1.msra.mxu0 %v705
    %707 = vmatprep.subr.mxu0 0.0
    %v708 = vand.u32 %v104, 4294901760
    %709 = vmatpush1.msra.mxu0 %v708
    %710 = vmatprep.subr.mxu0 0.0
    %v711 = vand.u32 %v105, 4294901760
    %712 = vmatpush1.msra.mxu0 %v711
    %713 = vmatprep.subr.mxu0 0.0
    %v714 = vand.u32 %v106, 4294901760
    %715 = vmatpush1.msra.mxu0 %v714
    %716 = vmatprep.subr.mxu0 0.0
    %v717 = vand.u32 %v107, 4294901760
    %718 = vmatpush1.msra.mxu0 %v717
    %719 = vmatprep.subr.mxu0 0.0
    %v720 = vand.u32 %v108, 4294901760
    %721 = vmatpush1.msra.mxu0 %v720
    %722 = vmatprep.subr.mxu0 0.0
    %v723 = vand.u32 %v109, 4294901760
    %724 = vmatpush1.msra.mxu0 %v723
    %725 = vmatprep.subr.mxu0 0.0
    %v726 = vand.u32 %v110, 4294901760
    %727 = vmatpush1.msra.mxu0 %v726
    %v728 = vand.u32 %v76, 4294901760
    %v729 = vsub.f32 %v76, %v728
    %v730 = vand.u32 %v729, 4294901760
    %731 = vmatprep.mubr.f32.mxu0 %v730
    %v732 = vand.u32 %v75, 4294901760
    %v733 = vsub.f32 %v75, %v732
    %v734 = vand.u32 %v733, 4294901760
    %735 = vmatmul.mubr.f32.gmra.mrb[0].mxu0 %v734
    %v736 = vpop.f32.mrb[0].mxu0
    %v737 = vadd.f32 %v629, %v736
    %v738 = vpop.f32.mrb[0].mxu0
    %739 = vdwg.mxu0
    %740 = vmatprep.subr.mxu0 0.0
    %v741 = vand.u32 %v79, 4294901760
    %v742 = vsub.f32 %v79, %v741
    %v743 = vand.u32 %v742, 4294901760
    %744 = vmatpush1.msra.mxu0 %v743
    %745 = vmatprep.subr.mxu0 0.0
    %v746 = vand.u32 %v80, 4294901760
    %v747 = vsub.f32 %v80, %v746
    %v748 = vand.u32 %v747, 4294901760
    %749 = vmatpush1.msra.mxu0 %v748
    %750 = vmatprep.subr.mxu0 0.0
    %v751 = vand.u32 %v81, 4294901760
    %v752 = vsub.f32 %v81, %v751
    %v753 = vand.u32 %v752, 4294901760
    %754 = vmatpush1.msra.mxu0 %v753
    %755 = vmatprep.subr.mxu0 0.0
    %v756 = vand.u32 %v82, 4294901760
    %v757 = vsub.f32 %v82, %v756
    %v758 = vand.u32 %v757, 4294901760
    %759 = vmatpush1.msra.mxu0 %v758
    %760 = vmatprep.subr.mxu0 0.0
    %v761 = vand.u32 %v83, 4294901760
    %v762 = vsub.f32 %v83, %v761
    %v763 = vand.u32 %v762, 4294901760
    %764 = vmatpush1.msra.mxu0 %v763
    %765 = vmatprep.subr.mxu0 0.0
    %v766 = vand.u32 %v84, 4294901760
    %v767 = vsub.f32 %v84, %v766
    %v768 = vand.u32 %v767, 4294901760
    %769 = vmatpush1.msra.mxu0 %v768
    %770 = vmatprep.subr.mxu0 0.0
    %v771 = vand.u32 %v85, 4294901760
    %v772 = vsub.f32 %v85, %v771
    %v773 = vand.u32 %v772, 4294901760
    %774 = vmatpush1.msra.mxu0 %v773
    %775 = vmatprep.subr.mxu0 0.0
    %v776 = vand.u32 %v86, 4294901760
    %v777 = vsub.f32 %v86, %v776
    %v778 = vand.u32 %v777, 4294901760
    %779 = vmatpush1.msra.mxu0 %v778
    %780 = vmatprep.subr.mxu0 0.0
    %v781 = vand.u32 %v87, 4294901760
    %v782 = vsub.f32 %v87, %v781
    %v783 = vand.u32 %v782, 4294901760
    %784 = vmatpush1.msra.mxu0 %v783
    %785 = vmatprep.subr.mxu0 0.0
    %v786 = vand.u32 %v88, 4294901760
    %v787 = vsub.f32 %v88, %v786
    %v788 = vand.u32 %v787, 4294901760
    %789 = vmatpush1.msra.mxu0 %v788
    %790 = vmatprep.subr.mxu0 0.0
    %v791 = vand.u32 %v89, 4294901760
    %v792 = vsub.f32 %v89, %v791
    %v793 = vand.u32 %v792, 4294901760
    %794 = vmatpush1.msra.mxu0 %v793
    %795 = vmatprep.subr.mxu0 0.0
    %v796 = vand.u32 %v90, 4294901760
    %v797 = vsub.f32 %v90, %v796
    %v798 = vand.u32 %v797, 4294901760
    %799 = vmatpush1.msra.mxu0 %v798
    %800 = vmatprep.subr.mxu0 0.0
    %v801 = vand.u32 %v91, 4294901760
    %v802 = vsub.f32 %v91, %v801
    %v803 = vand.u32 %v802, 4294901760
    %804 = vmatpush1.msra.mxu0 %v803
    %805 = vmatprep.subr.mxu0 0.0
    %v806 = vand.u32 %v92, 4294901760
    %v807 = vsub.f32 %v92, %v806
    %v808 = vand.u32 %v807, 4294901760
    %809 = vmatpush1.msra.mxu0 %v808
    %810 = vmatprep.subr.mxu0 0.0
    %v811 = vand.u32 %v93, 4294901760
    %v812 = vsub.f32 %v93, %v811
    %v813 = vand.u32 %v812, 4294901760
    %814 = vmatpush1.msra.mxu0 %v813
    %815 = vmatprep.subr.mxu0 0.0
    %v816 = vand.u32 %v94, 4294901760
    %v817 = vsub.f32 %v94, %v816
    %v818 = vand.u32 %v817, 4294901760
    %819 = vmatpush1.msra.mxu0 %v818
    %820 = vmatprep.subr.mxu0 0.0
    %v821 = vand.u32 %v95, 4294901760
    %v822 = vsub.f32 %v95, %v821
    %v823 = vand.u32 %v822, 4294901760
    %824 = vmatpush1.msra.mxu0 %v823
    %825 = vmatprep.subr.mxu0 0.0
    %v826 = vand.u32 %v96, 4294901760
    %v827 = vsub.f32 %v96, %v826
    %v828 = vand.u32 %v827, 4294901760
    %829 = vmatpush1.msra.mxu0 %v828
    %830 = vmatprep.subr.mxu0 0.0
    %v831 = vand.u32 %v97, 4294901760
    %v832 = vsub.f32 %v97, %v831
    %v833 = vand.u32 %v832, 4294901760
    %834 = vmatpush1.msra.mxu0 %v833
    %835 = vmatprep.subr.mxu0 0.0
    %v836 = vand.u32 %v98, 4294901760
    %v837 = vsub.f32 %v98, %v836
    %v838 = vand.u32 %v837, 4294901760
    %839 = vmatpush1.msra.mxu0 %v838
    %840 = vmatprep.subr.mxu0 0.0
    %v841 = vand.u32 %v99, 4294901760
    %v842 = vsub.f32 %v99, %v841
    %v843 = vand.u32 %v842, 4294901760
    %844 = vmatpush1.msra.mxu0 %v843
    %845 = vmatprep.subr.mxu0 0.0
    %v846 = vand.u32 %v100, 4294901760
    %v847 = vsub.f32 %v100, %v846
    %v848 = vand.u32 %v847, 4294901760
    %849 = vmatpush1.msra.mxu0 %v848
    %850 = vmatprep.subr.mxu0 0.0
    %v851 = vand.u32 %v101, 4294901760
    %v852 = vsub.f32 %v101, %v851
    %v853 = vand.u32 %v852, 4294901760
    %854 = vmatpush1.msra.mxu0 %v853
    %855 = vmatprep.subr.mxu0 0.0
    %v856 = vand.u32 %v102, 4294901760
    %v857 = vsub.f32 %v102, %v856
    %v858 = vand.u32 %v857, 4294901760
    %859 = vmatpush1.msra.mxu0 %v858
    %860 = vmatprep.subr.mxu0 0.0
    %v861 = vand.u32 %v103, 4294901760
    %v862 = vsub.f32 %v103, %v861
    %v863 = vand.u32 %v862, 4294901760
    %864 = vmatpush1.msra.mxu0 %v863
    %865 = vmatprep.subr.mxu0 0.0
    %v866 = vand.u32 %v104, 4294901760
    %v867 = vsub.f32 %v104, %v866
    %v868 = vand.u32 %v867, 4294901760
    %869 = vmatpush1.msra.mxu0 %v868
    %870 = vmatprep.subr.mxu0 0.0
    %v871 = vand.u32 %v105, 4294901760
    %v872 = vsub.f32 %v105, %v871
    %v873 = vand.u32 %v872, 4294901760
    %874 = vmatpush1.msra.mxu0 %v873
    %875 = vmatprep.subr.mxu0 0.0
    %v876 = vand.u32 %v106, 4294901760
    %v877 = vsub.f32 %v106, %v876
    %v878 = vand.u32 %v877, 4294901760
    %879 = vmatpush1.msra.mxu0 %v878
    %880 = vmatprep.subr.mxu0 0.0
    %v881 = vand.u32 %v107, 4294901760
    %v882 = vsub.f32 %v107, %v881
    %v883 = vand.u32 %v882, 4294901760
    %884 = vmatpush1.msra.mxu0 %v883
    %885 = vmatprep.subr.mxu0 0.0
    %v886 = vand.u32 %v108, 4294901760
    %v887 = vsub.f32 %v108, %v886
    %v888 = vand.u32 %v887, 4294901760
    %889 = vmatpush1.msra.mxu0 %v888
    %890 = vmatprep.subr.mxu0 0.0
    %v891 = vand.u32 %v109, 4294901760
    %v892 = vsub.f32 %v109, %v891
    %v893 = vand.u32 %v892, 4294901760
    %894 = vmatpush1.msra.mxu0 %v893
    %895 = vmatprep.subr.mxu0 0.0
    %v896 = vand.u32 %v110, 4294901760
    %v897 = vsub.f32 %v110, %v896
    %v898 = vand.u32 %v897, 4294901760
    %899 = vmatpush1.msra.mxu0 %v898
    %v900 = vand.u32 %v76, 4294901760
    %901 = vmatprep.mubr.f32.mxu0 %v900
    %v902 = vand.u32 %v75, 4294901760
    %903 = vmatmul.mubr.f32.gmra.mrb[0].mxu0 %v902
    %v904 = vpop.f32.mrb[0].mxu0
    %v905 = vadd.f32 %v737, %v904
    %v906 = vpop.f32.mrb[0].mxu0
    %907 = vdwg.mxu0
    %908 = vmatprep.subr.mxu0 0.0
    %v909 = vand.u32 %v79, 4294901760
    %910 = vmatpush1.msra.mxu0 %v909
    %911 = vmatprep.subr.mxu0 0.0
    %v912 = vand.u32 %v80, 4294901760
    %913 = vmatpush1.msra.mxu0 %v912
    %914 = vmatprep.subr.mxu0 0.0
    %v915 = vand.u32 %v81, 4294901760
    %916 = vmatpush1.msra.mxu0 %v915
    %917 = vmatprep.subr.mxu0 0.0
    %v918 = vand.u32 %v82, 4294901760
    %919 = vmatpush1.msra.mxu0 %v918
    %920 = vmatprep.subr.mxu0 0.0
    %v921 = vand.u32 %v83, 4294901760
    %922 = vmatpush1.msra.mxu0 %v921
    %923 = vmatprep.subr.mxu0 0.0
    %v924 = vand.u32 %v84, 4294901760
    %925 = vmatpush1.msra.mxu0 %v924
    %926 = vmatprep.subr.mxu0 0.0
    %v927 = vand.u32 %v85, 4294901760
    %928 = vmatpush1.msra.mxu0 %v927
    %929 = vmatprep.subr.mxu0 0.0
    %v930 = vand.u32 %v86, 4294901760
    %931 = vmatpush1.msra.mxu0 %v930
    %932 = vmatprep.subr.mxu0 0.0
    %v933 = vand.u32 %v87, 4294901760
    %934 = vmatpush1.msra.mxu0 %v933
    %935 = vmatprep.subr.mxu0 0.0
    %v936 = vand.u32 %v88, 4294901760
    %937 = vmatpush1.msra.mxu0 %v936
    %938 = vmatprep.subr.mxu0 0.0
    %v939 = vand.u32 %v89, 4294901760
    %940 = vmatpush1.msra.mxu0 %v939
    %941 = vmatprep.subr.mxu0 0.0
    %v942 = vand.u32 %v90, 4294901760
    %943 = vmatpush1.msra.mxu0 %v942
    %944 = vmatprep.subr.mxu0 0.0
    %v945 = vand.u32 %v91, 4294901760
    %946 = vmatpush1.msra.mxu0 %v945
    %947 = vmatprep.subr.mxu0 0.0
    %v948 = vand.u32 %v92, 4294901760
    %949 = vmatpush1.msra.mxu0 %v948
    %950 = vmatprep.subr.mxu0 0.0
    %v951 = vand.u32 %v93, 4294901760
    %952 = vmatpush1.msra.mxu0 %v951
    %953 = vmatprep.subr.mxu0 0.0
    %v954 = vand.u32 %v94, 4294901760
    %955 = vmatpush1.msra.mxu0 %v954
    %956 = vmatprep.subr.mxu0 0.0
    %v957 = vand.u32 %v95, 4294901760
    %958 = vmatpush1.msra.mxu0 %v957
    %959 = vmatprep.subr.mxu0 0.0
    %v960 = vand.u32 %v96, 4294901760
    %961 = vmatpush1.msra.mxu0 %v960
    %962 = vmatprep.subr.mxu0 0.0
    %v963 = vand.u32 %v97, 4294901760
    %964 = vmatpush1.msra.mxu0 %v963
    %965 = vmatprep.subr.mxu0 0.0
    %v966 = vand.u32 %v98, 4294901760
    %967 = vmatpush1.msra.mxu0 %v966
    %968 = vmatprep.subr.mxu0 0.0
    %v969 = vand.u32 %v99, 4294901760
    %970 = vmatpush1.msra.mxu0 %v969
    %971 = vmatprep.subr.mxu0 0.0
    %v972 = vand.u32 %v100, 4294901760
    %973 = vmatpush1.msra.mxu0 %v972
    %974 = vmatprep.subr.mxu0 0.0
    %v975 = vand.u32 %v101, 4294901760
    %976 = vmatpush1.msra.mxu0 %v975
    %977 = vmatprep.subr.mxu0 0.0
    %v978 = vand.u32 %v102, 4294901760
    %979 = vmatpush1.msra.mxu0 %v978
    %980 = vmatprep.subr.mxu0 0.0
    %v981 = vand.u32 %v103, 4294901760
    %982 = vmatpush1.msra.mxu0 %v981
    %983 = vmatprep.subr.mxu0 0.0
    %v984 = vand.u32 %v104, 4294901760
    %985 = vmatpush1.msra.mxu0 %v984
    %986 = vmatprep.subr.mxu0 0.0
    %v987 = vand.u32 %v105, 4294901760
    %988 = vmatpush1.msra.mxu0 %v987
    %989 = vmatprep.subr.mxu0 0.0
    %v990 = vand.u32 %v106, 4294901760
    %991 = vmatpush1.msra.mxu0 %v990
    %992 = vmatprep.subr.mxu0 0.0
    %v993 = vand.u32 %v107, 4294901760
    %994 = vmatpush1.msra.mxu0 %v993
    %995 = vmatprep.subr.mxu0 0.0
    %v996 = vand.u32 %v108, 4294901760
    %997 = vmatpush1.msra.mxu0 %v996
    %998 = vmatprep.subr.mxu0 0.0
    %v999 = vand.u32 %v109, 4294901760
    %1000 = vmatpush1.msra.mxu0 %v999
    %1001 = vmatprep.subr.mxu0 0.0
    %v1002 = vand.u32 %v110, 4294901760
    %1003 = vmatpush1.msra.mxu0 %v1002
    %v1004 = vand.u32 %v76, 4294901760
    %1005 = vmatprep.mubr.f32.mxu0 %v1004
    %v1006 = vand.u32 %v75, 4294901760
    %1007 = vmatmul.mubr.f32.gmra.mrb[0].mxu0 %v1006
    %v1008 = vpop.f32.mrb[0].mxu0
    %v1009 = vadd.f32 %v905, %v1008
    %v1010 = vpop.f32.mrb[0].mxu0
    %1011 = vdwg.mxu0
    %1012 = vmatprep.subr.mxu0 0.0
    %v1013 = vand.u32 %v111, 4294901760
    %1014 = vmatpush1.msra.mxu0 %v1013
    %1015 = vmatprep.subr.mxu0 0.0
    %v1016 = vand.u32 %v112, 4294901760
    %1017 = vmatpush1.msra.mxu0 %v1016
    %1018 = vmatprep.subr.mxu0 0.0
    %v1019 = vand.u32 %v113, 4294901760
    %1020 = vmatpush1.msra.mxu0 %v1019
    %1021 = vmatprep.subr.mxu0 0.0
    %v1022 = vand.u32 %v114, 4294901760
    %1023 = vmatpush1.msra.mxu0 %v1022
    %1024 = vmatprep.subr.mxu0 0.0
    %v1025 = vand.u32 %v115, 4294901760
    %1026 = vmatpush1.msra.mxu0 %v1025
    %1027 = vmatprep.subr.mxu0 0.0
    %v1028 = vand.u32 %v116, 4294901760
    %1029 = vmatpush1.msra.mxu0 %v1028
    %1030 = vmatprep.subr.mxu0 0.0
    %v1031 = vand.u32 %v117, 4294901760
    %1032 = vmatpush1.msra.mxu0 %v1031
    %1033 = vmatprep.subr.mxu0 0.0
    %v1034 = vand.u32 %v118, 4294901760
    %1035 = vmatpush1.msra.mxu0 %v1034
    %1036 = vmatprep.subr.mxu0 0.0
    %v1037 = vand.u32 %v119, 4294901760
    %1038 = vmatpush1.msra.mxu0 %v1037
    %1039 = vmatprep.subr.mxu0 0.0
    %v1040 = vand.u32 %v120, 4294901760
    %1041 = vmatpush1.msra.mxu0 %v1040
    %1042 = vmatprep.subr.mxu0 0.0
    %v1043 = vand.u32 %v121, 4294901760
    %1044 = vmatpush1.msra.mxu0 %v1043
    %1045 = vmatprep.subr.mxu0 0.0
    %v1046 = vand.u32 %v122, 4294901760
    %1047 = vmatpush1.msra.mxu0 %v1046
    %1048 = vmatprep.subr.mxu0 0.0
    %v1049 = vand.u32 %v123, 4294901760
    %1050 = vmatpush1.msra.mxu0 %v1049
    %1051 = vmatprep.subr.mxu0 0.0
    %v1052 = vand.u32 %v124, 4294901760
    %1053 = vmatpush1.msra.mxu0 %v1052
    %1054 = vmatprep.subr.mxu0 0.0
    %v1055 = vand.u32 %v125, 4294901760
    %1056 = vmatpush1.msra.mxu0 %v1055
    %1057 = vmatprep.subr.mxu0 0.0
    %v1058 = vand.u32 %v126, 4294901760
    %1059 = vmatpush1.msra.mxu0 %v1058
    %1060 = vmatprep.subr.mxu0 0.0
    %v1061 = vand.u32 %v127, 4294901760
    %1062 = vmatpush1.msra.mxu0 %v1061
    %1063 = vmatprep.subr.mxu0 0.0
    %v1064 = vand.u32 %v128, 4294901760
    %1065 = vmatpush1.msra.mxu0 %v1064
    %1066 = vmatprep.subr.mxu0 0.0
    %v1067 = vand.u32 %v129, 4294901760
    %1068 = vmatpush1.msra.mxu0 %v1067
    %1069 = vmatprep.subr.mxu0 0.0
    %v1070 = vand.u32 %v130, 4294901760
    %1071 = vmatpush1.msra.mxu0 %v1070
    %1072 = vmatprep.subr.mxu0 0.0
    %v1073 = vand.u32 %v131, 4294901760
    %1074 = vmatpush1.msra.mxu0 %v1073
    %1075 = vmatprep.subr.mxu0 0.0
    %v1076 = vand.u32 %v132, 4294901760
    %1077 = vmatpush1.msra.mxu0 %v1076
    %1078 = vmatprep.subr.mxu0 0.0
    %v1079 = vand.u32 %v133, 4294901760
    %1080 = vmatpush1.msra.mxu0 %v1079
    %1081 = vmatprep.subr.mxu0 0.0
    %v1082 = vand.u32 %v134, 4294901760
    %1083 = vmatpush1.msra.mxu0 %v1082
    %1084 = vmatprep.subr.mxu0 0.0
    %v1085 = vand.u32 %v135, 4294901760
    %1086 = vmatpush1.msra.mxu0 %v1085
    %1087 = vmatprep.subr.mxu0 0.0
    %v1088 = vand.u32 %v136, 4294901760
    %1089 = vmatpush1.msra.mxu0 %v1088
    %1090 = vmatprep.subr.mxu0 0.0
    %v1091 = vand.u32 %v137, 4294901760
    %1092 = vmatpush1.msra.mxu0 %v1091
    %1093 = vmatprep.subr.mxu0 0.0
    %v1094 = vand.u32 %v138, 4294901760
    %1095 = vmatpush1.msra.mxu0 %v1094
    %1096 = vmatprep.subr.mxu0 0.0
    %v1097 = vand.u32 %v139, 4294901760
    %1098 = vmatpush1.msra.mxu0 %v1097
    %1099 = vmatprep.subr.mxu0 0.0
    %v1100 = vand.u32 %v140, 4294901760
    %1101 = vmatpush1.msra.mxu0 %v1100
    %1102 = vmatprep.subr.mxu0 0.0
    %v1103 = vand.u32 %v141, 4294901760
    %1104 = vmatpush1.msra.mxu0 %v1103
    %1105 = vmatprep.subr.mxu0 0.0
    %v1106 = vand.u32 %v142, 4294901760
    %1107 = vmatpush1.msra.mxu0 %v1106
    %v1108 = vand.u32 %v78, 4294901760
    %v1109 = vsub.f32 %v78, %v1108
    %v1110 = vand.u32 %v1109, 4294901760
    %v1111 = vsub.f32 %v1109, %v1110
    %v1112 = vand.u32 %v1111, 4294901760
    %1113 = vmatprep.mubr.f32.mxu0 %v1112
    %v1114 = vand.u32 %v77, 4294901760
    %v1115 = vsub.f32 %v77, %v1114
    %v1116 = vand.u32 %v1115, 4294901760
    %v1117 = vsub.f32 %v1115, %v1116
    %v1118 = vand.u32 %v1117, 4294901760
    %1119 = vmatmul.mubr.f32.gmra.mrb[0].mxu0 %v1118
    %v1120 = vpop.f32.mrb[0].mxu0
    %v1121 = vadd.f32 %v1009, %v1120
    %v1122 = vpop.f32.mrb[0].mxu0
    %1123 = vdwg.mxu0
    %1124 = vmatprep.subr.mxu0 0.0
    %v1125 = vand.u32 %v111, 4294901760
    %v1126 = vsub.f32 %v111, %v1125
    %v1127 = vand.u32 %v1126, 4294901760
    %v1128 = vsub.f32 %v1126, %v1127
    %v1129 = vand.u32 %v1128, 4294901760
    %1130 = vmatpush1.msra.mxu0 %v1129
    %1131 = vmatprep.subr.mxu0 0.0
    %v1132 = vand.u32 %v112, 4294901760
    %v1133 = vsub.f32 %v112, %v1132
    %v1134 = vand.u32 %v1133, 4294901760
    %v1135 = vsub.f32 %v1133, %v1134
    %v1136 = vand.u32 %v1135, 4294901760
    %1137 = vmatpush1.msra.mxu0 %v1136
    %1138 = vmatprep.subr.mxu0 0.0
    %v1139 = vand.u32 %v113, 4294901760
    %v1140 = vsub.f32 %v113, %v1139
    %v1141 = vand.u32 %v1140, 4294901760
    %v1142 = vsub.f32 %v1140, %v1141
    %v1143 = vand.u32 %v1142, 4294901760
    %1144 = vmatpush1.msra.mxu0 %v1143
    %1145 = vmatprep.subr.mxu0 0.0
    %v1146 = vand.u32 %v114, 4294901760
    %v1147 = vsub.f32 %v114, %v1146
    %v1148 = vand.u32 %v1147, 4294901760
    %v1149 = vsub.f32 %v1147, %v1148
    %v1150 = vand.u32 %v1149, 4294901760
    %1151 = vmatpush1.msra.mxu0 %v1150
    %1152 = vmatprep.subr.mxu0 0.0
    %v1153 = vand.u32 %v115, 4294901760
    %v1154 = vsub.f32 %v115, %v1153
    %v1155 = vand.u32 %v1154, 4294901760
    %v1156 = vsub.f32 %v1154, %v1155
    %v1157 = vand.u32 %v1156, 4294901760
    %1158 = vmatpush1.msra.mxu0 %v1157
    %1159 = vmatprep.subr.mxu0 0.0
    %v1160 = vand.u32 %v116, 4294901760
    %v1161 = vsub.f32 %v116, %v1160
    %v1162 = vand.u32 %v1161, 4294901760
    %v1163 = vsub.f32 %v1161, %v1162
    %v1164 = vand.u32 %v1163, 4294901760
    %1165 = vmatpush1.msra.mxu0 %v1164
    %1166 = vmatprep.subr.mxu0 0.0
    %v1167 = vand.u32 %v117, 4294901760
    %v1168 = vsub.f32 %v117, %v1167
    %v1169 = vand.u32 %v1168, 4294901760
    %v1170 = vsub.f32 %v1168, %v1169
    %v1171 = vand.u32 %v1170, 4294901760
    %1172 = vmatpush1.msra.mxu0 %v1171
    %1173 = vmatprep.subr.mxu0 0.0
    %v1174 = vand.u32 %v118, 4294901760
    %v1175 = vsub.f32 %v118, %v1174
    %v1176 = vand.u32 %v1175, 4294901760
    %v1177 = vsub.f32 %v1175, %v1176
    %v1178 = vand.u32 %v1177, 4294901760
    %1179 = vmatpush1.msra.mxu0 %v1178
    %1180 = vmatprep.subr.mxu0 0.0
    %v1181 = vand.u32 %v119, 4294901760
    %v1182 = vsub.f32 %v119, %v1181
    %v1183 = vand.u32 %v1182, 4294901760
    %v1184 = vsub.f32 %v1182, %v1183
    %v1185 = vand.u32 %v1184, 4294901760
    %1186 = vmatpush1.msra.mxu0 %v1185
    %1187 = vmatprep.subr.mxu0 0.0
    %v1188 = vand.u32 %v120, 4294901760
    %v1189 = vsub.f32 %v120, %v1188
    %v1190 = vand.u32 %v1189, 4294901760
    %v1191 = vsub.f32 %v1189, %v1190
    %v1192 = vand.u32 %v1191, 4294901760
    %1193 = vmatpush1.msra.mxu0 %v1192
    %1194 = vmatprep.subr.mxu0 0.0
    %v1195 = vand.u32 %v121, 4294901760
    %v1196 = vsub.f32 %v121, %v1195
    %v1197 = vand.u32 %v1196, 4294901760
    %v1198 = vsub.f32 %v1196, %v1197
    %v1199 = vand.u32 %v1198, 4294901760
    %1200 = vmatpush1.msra.mxu0 %v1199
    %1201 = vmatprep.subr.mxu0 0.0
    %v1202 = vand.u32 %v122, 4294901760
    %v1203 = vsub.f32 %v122, %v1202
    %v1204 = vand.u32 %v1203, 4294901760
    %v1205 = vsub.f32 %v1203, %v1204
    %v1206 = vand.u32 %v1205, 4294901760
    %1207 = vmatpush1.msra.mxu0 %v1206
    %1208 = vmatprep.subr.mxu0 0.0
    %v1209 = vand.u32 %v123, 4294901760
    %v1210 = vsub.f32 %v123, %v1209
    %v1211 = vand.u32 %v1210, 4294901760
    %v1212 = vsub.f32 %v1210, %v1211
    %v1213 = vand.u32 %v1212, 4294901760
    %1214 = vmatpush1.msra.mxu0 %v1213
    %1215 = vmatprep.subr.mxu0 0.0
    %v1216 = vand.u32 %v124, 4294901760
    %v1217 = vsub.f32 %v124, %v1216
    %v1218 = vand.u32 %v1217, 4294901760
    %v1219 = vsub.f32 %v1217, %v1218
    %v1220 = vand.u32 %v1219, 4294901760
    %1221 = vmatpush1.msra.mxu0 %v1220
    %1222 = vmatprep.subr.mxu0 0.0
    %v1223 = vand.u32 %v125, 4294901760
    %v1224 = vsub.f32 %v125, %v1223
    %v1225 = vand.u32 %v1224, 4294901760
    %v1226 = vsub.f32 %v1224, %v1225
    %v1227 = vand.u32 %v1226, 4294901760
    %1228 = vmatpush1.msra.mxu0 %v1227
    %1229 = vmatprep.subr.mxu0 0.0
    %v1230 = vand.u32 %v126, 4294901760
    %v1231 = vsub.f32 %v126, %v1230
    %v1232 = vand.u32 %v1231, 4294901760
    %v1233 = vsub.f32 %v1231, %v1232
    %v1234 = vand.u32 %v1233, 4294901760
    %1235 = vmatpush1.msra.mxu0 %v1234
    %1236 = vmatprep.subr.mxu0 0.0
    %v1237 = vand.u32 %v127, 4294901760
    %v1238 = vsub.f32 %v127, %v1237
    %v1239 = vand.u32 %v1238, 4294901760
    %v1240 = vsub.f32 %v1238, %v1239
    %v1241 = vand.u32 %v1240, 4294901760
    %1242 = vmatpush1.msra.mxu0 %v1241
    %1243 = vmatprep.subr.mxu0 0.0
    %v1244 = vand.u32 %v128, 4294901760
    %v1245 = vsub.f32 %v128, %v1244
    %v1246 = vand.u32 %v1245, 4294901760
    %v1247 = vsub.f32 %v1245, %v1246
    %v1248 = vand.u32 %v1247, 4294901760
    %1249 = vmatpush1.msra.mxu0 %v1248
    %1250 = vmatprep.subr.mxu0 0.0
    %v1251 = vand.u32 %v129, 4294901760
    %v1252 = vsub.f32 %v129, %v1251
    %v1253 = vand.u32 %v1252, 4294901760
    %v1254 = vsub.f32 %v1252, %v1253
    %v1255 = vand.u32 %v1254, 4294901760
    %1256 = vmatpush1.msra.mxu0 %v1255
    %1257 = vmatprep.subr.mxu0 0.0
    %v1258 = vand.u32 %v130, 4294901760
    %v1259 = vsub.f32 %v130, %v1258
    %v1260 = vand.u32 %v1259, 4294901760
    %v1261 = vsub.f32 %v1259, %v1260
    %v1262 = vand.u32 %v1261, 4294901760
    %1263 = vmatpush1.msra.mxu0 %v1262
    %1264 = vmatprep.subr.mxu0 0.0
    %v1265 = vand.u32 %v131, 4294901760
    %v1266 = vsub.f32 %v131, %v1265
    %v1267 = vand.u32 %v1266, 4294901760
    %v1268 = vsub.f32 %v1266, %v1267
    %v1269 = vand.u32 %v1268, 4294901760
    %1270 = vmatpush1.msra.mxu0 %v1269
    %1271 = vmatprep.subr.mxu0 0.0
    %v1272 = vand.u32 %v132, 4294901760
    %v1273 = vsub.f32 %v132, %v1272
    %v1274 = vand.u32 %v1273, 4294901760
    %v1275 = vsub.f32 %v1273, %v1274
    %v1276 = vand.u32 %v1275, 4294901760
    %1277 = vmatpush1.msra.mxu0 %v1276
    %1278 = vmatprep.subr.mxu0 0.0
    %v1279 = vand.u32 %v133, 4294901760
    %v1280 = vsub.f32 %v133, %v1279
    %v1281 = vand.u32 %v1280, 4294901760
    %v1282 = vsub.f32 %v1280, %v1281
    %v1283 = vand.u32 %v1282, 4294901760
    %1284 = vmatpush1.msra.mxu0 %v1283
    %1285 = vmatprep.subr.mxu0 0.0
    %v1286 = vand.u32 %v134, 4294901760
    %v1287 = vsub.f32 %v134, %v1286
    %v1288 = vand.u32 %v1287, 4294901760
    %v1289 = vsub.f32 %v1287, %v1288
    %v1290 = vand.u32 %v1289, 4294901760
    %1291 = vmatpush1.msra.mxu0 %v1290
    %1292 = vmatprep.subr.mxu0 0.0
    %v1293 = vand.u32 %v135, 4294901760
    %v1294 = vsub.f32 %v135, %v1293
    %v1295 = vand.u32 %v1294, 4294901760
    %v1296 = vsub.f32 %v1294, %v1295
    %v1297 = vand.u32 %v1296, 4294901760
    %1298 = vmatpush1.msra.mxu0 %v1297
    %1299 = vmatprep.subr.mxu0 0.0
    %v1300 = vand.u32 %v136, 4294901760
    %v1301 = vsub.f32 %v136, %v1300
    %v1302 = vand.u32 %v1301, 4294901760
    %v1303 = vsub.f32 %v1301, %v1302
    %v1304 = vand.u32 %v1303, 4294901760
    %1305 = vmatpush1.msra.mxu0 %v1304
    %1306 = vmatprep.subr.mxu0 0.0
    %v1307 = vand.u32 %v137, 4294901760
    %v1308 = vsub.f32 %v137, %v1307
    %v1309 = vand.u32 %v1308, 4294901760
    %v1310 = vsub.f32 %v1308, %v1309
    %v1311 = vand.u32 %v1310, 4294901760
    %1312 = vmatpush1.msra.mxu0 %v1311
    %1313 = vmatprep.subr.mxu0 0.0
    %v1314 = vand.u32 %v138, 4294901760
    %v1315 = vsub.f32 %v138, %v1314
    %v1316 = vand.u32 %v1315, 4294901760
    %v1317 = vsub.f32 %v1315, %v1316
    %v1318 = vand.u32 %v1317, 4294901760
    %1319 = vmatpush1.msra.mxu0 %v1318
    %1320 = vmatprep.subr.mxu0 0.0
    %v1321 = vand.u32 %v139, 4294901760
    %v1322 = vsub.f32 %v139, %v1321
    %v1323 = vand.u32 %v1322, 4294901760
    %v1324 = vsub.f32 %v1322, %v1323
    %v1325 = vand.u32 %v1324, 4294901760
    %1326 = vmatpush1.msra.mxu0 %v1325
    %1327 = vmatprep.subr.mxu0 0.0
    %v1328 = vand.u32 %v140, 4294901760
    %v1329 = vsub.f32 %v140, %v1328
    %v1330 = vand.u32 %v1329, 4294901760
    %v1331 = vsub.f32 %v1329, %v1330
    %v1332 = vand.u32 %v1331, 4294901760
    %1333 = vmatpush1.msra.mxu0 %v1332
    %1334 = vmatprep.subr.mxu0 0.0
    %v1335 = vand.u32 %v141, 4294901760
    %v1336 = vsub.f32 %v141, %v1335
    %v1337 = vand.u32 %v1336, 4294901760
    %v1338 = vsub.f32 %v1336, %v1337
    %v1339 = vand.u32 %v1338, 4294901760
    %1340 = vmatpush1.msra.mxu0 %v1339
    %1341 = vmatprep.subr.mxu0 0.0
    %v1342 = vand.u32 %v142, 4294901760
    %v1343 = vsub.f32 %v142, %v1342
    %v1344 = vand.u32 %v1343, 4294901760
    %v1345 = vsub.f32 %v1343, %v1344
    %v1346 = vand.u32 %v1345, 4294901760
    %1347 = vmatpush1.msra.mxu0 %v1346
    %v1348 = vand.u32 %v78, 4294901760
    %1349 = vmatprep.mubr.f32.mxu0 %v1348
    %v1350 = vand.u32 %v77, 4294901760
    %1351 = vmatmul.mubr.f32.gmra.mrb[0].mxu0 %v1350
    %v1352 = vpop.f32.mrb[0].mxu0
    %v1353 = vadd.f32 %v1121, %v1352
    %v1354 = vpop.f32.mrb[0].mxu0
    %1355 = vdwg.mxu0
    %1356 = vmatprep.subr.mxu0 0.0
    %v1357 = vand.u32 %v111, 4294901760
    %v1358 = vsub.f32 %v111, %v1357
    %1359 = vmatpush1.msra.mxu0 %v1358
    %1360 = vmatprep.subr.mxu0 0.0
    %v1361 = vand.u32 %v112, 4294901760
    %v1362 = vsub.f32 %v112, %v1361
    %1363 = vmatpush1.msra.mxu0 %v1362
    %1364 = vmatprep.subr.mxu0 0.0
    %v1365 = vand.u32 %v113, 4294901760
    %v1366 = vsub.f32 %v113, %v1365
    %1367 = vmatpush1.msra.mxu0 %v1366
    %1368 = vmatprep.subr.mxu0 0.0
    %v1369 = vand.u32 %v114, 4294901760
    %v1370 = vsub.f32 %v114, %v1369
    %1371 = vmatpush1.msra.mxu0 %v1370
    %1372 = vmatprep.subr.mxu0 0.0
    %v1373 = vand.u32 %v115, 4294901760
    %v1374 = vsub.f32 %v115, %v1373
    %1375 = vmatpush1.msra.mxu0 %v1374
    %1376 = vmatprep.subr.mxu0 0.0
    %v1377 = vand.u32 %v116, 4294901760
    %v1378 = vsub.f32 %v116, %v1377
    %1379 = vmatpush1.msra.mxu0 %v1378
    %1380 = vmatprep.subr.mxu0 0.0
    %v1381 = vand.u32 %v117, 4294901760
    %v1382 = vsub.f32 %v117, %v1381
    %1383 = vmatpush1.msra.mxu0 %v1382
    %1384 = vmatprep.subr.mxu0 0.0
    %v1385 = vand.u32 %v118, 4294901760
    %v1386 = vsub.f32 %v118, %v1385
    %1387 = vmatpush1.msra.mxu0 %v1386
    %1388 = vmatprep.subr.mxu0 0.0
    %v1389 = vand.u32 %v119, 4294901760
    %v1390 = vsub.f32 %v119, %v1389
    %1391 = vmatpush1.msra.mxu0 %v1390
    %1392 = vmatprep.subr.mxu0 0.0
    %v1393 = vand.u32 %v120, 4294901760
    %v1394 = vsub.f32 %v120, %v1393
    %1395 = vmatpush1.msra.mxu0 %v1394
    %1396 = vmatprep.subr.mxu0 0.0
    %v1397 = vand.u32 %v121, 4294901760
    %v1398 = vsub.f32 %v121, %v1397
    %1399 = vmatpush1.msra.mxu0 %v1398
    %1400 = vmatprep.subr.mxu0 0.0
    %v1401 = vand.u32 %v122, 4294901760
    %v1402 = vsub.f32 %v122, %v1401
    %1403 = vmatpush1.msra.mxu0 %v1402
    %1404 = vmatprep.subr.mxu0 0.0
    %v1405 = vand.u32 %v123, 4294901760
    %v1406 = vsub.f32 %v123, %v1405
    %1407 = vmatpush1.msra.mxu0 %v1406
    %1408 = vmatprep.subr.mxu0 0.0
    %v1409 = vand.u32 %v124, 4294901760
    %v1410 = vsub.f32 %v124, %v1409
    %1411 = vmatpush1.msra.mxu0 %v1410
    %1412 = vmatprep.subr.mxu0 0.0
    %v1413 = vand.u32 %v125, 4294901760
    %v1414 = vsub.f32 %v125, %v1413
    %1415 = vmatpush1.msra.mxu0 %v1414
    %1416 = vmatprep.subr.mxu0 0.0
    %v1417 = vand.u32 %v126, 4294901760
    %v1418 = vsub.f32 %v126, %v1417
    %1419 = vmatpush1.msra.mxu0 %v1418
    %1420 = vmatprep.subr.mxu0 0.0
    %v1421 = vand.u32 %v127, 4294901760
    %v1422 = vsub.f32 %v127, %v1421
    %1423 = vmatpush1.msra.mxu0 %v1422
    %1424 = vmatprep.subr.mxu0 0.0
    %v1425 = vand.u32 %v128, 4294901760
    %v1426 = vsub.f32 %v128, %v1425
    %1427 = vmatpush1.msra.mxu0 %v1426
    %1428 = vmatprep.subr.mxu0 0.0
    %v1429 = vand.u32 %v129, 4294901760
    %v1430 = vsub.f32 %v129, %v1429
    %1431 = vmatpush1.msra.mxu0 %v1430
    %1432 = vmatprep.subr.mxu0 0.0
    %v1433 = vand.u32 %v130, 4294901760
    %v1434 = vsub.f32 %v130, %v1433
    %1435 = vmatpush1.msra.mxu0 %v1434
    %1436 = vmatprep.subr.mxu0 0.0
    %v1437 = vand.u32 %v131, 4294901760
    %v1438 = vsub.f32 %v131, %v1437
    %1439 = vmatpush1.msra.mxu0 %v1438
    %1440 = vmatprep.subr.mxu0 0.0
    %v1441 = vand.u32 %v132, 4294901760
    %v1442 = vsub.f32 %v132, %v1441
    %1443 = vmatpush1.msra.mxu0 %v1442
    %1444 = vmatprep.subr.mxu0 0.0
    %v1445 = vand.u32 %v133, 4294901760
    %v1446 = vsub.f32 %v133, %v1445
    %1447 = vmatpush1.msra.mxu0 %v1446
    %1448 = vmatprep.subr.mxu0 0.0
    %v1449 = vand.u32 %v134, 4294901760
    %v1450 = vsub.f32 %v134, %v1449
    %1451 = vmatpush1.msra.mxu0 %v1450
    %1452 = vmatprep.subr.mxu0 0.0
    %v1453 = vand.u32 %v135, 4294901760
    %v1454 = vsub.f32 %v135, %v1453
    %1455 = vmatpush1.msra.mxu0 %v1454
    %1456 = vmatprep.subr.mxu0 0.0
    %v1457 = vand.u32 %v136, 4294901760
    %v1458 = vsub.f32 %v136, %v1457
    %1459 = vmatpush1.msra.mxu0 %v1458
    %1460 = vmatprep.subr.mxu0 0.0
    %v1461 = vand.u32 %v137, 4294901760
    %v1462 = vsub.f32 %v137, %v1461
    %1463 = vmatpush1.msra.mxu0 %v1462
    %1464 = vmatprep.subr.mxu0 0.0
    %v1465 = vand.u32 %v138, 4294901760
    %v1466 = vsub.f32 %v138, %v1465
    %1467 = vmatpush1.msra.mxu0 %v1466
    %1468 = vmatprep.subr.mxu0 0.0
    %v1469 = vand.u32 %v139, 4294901760
    %v1470 = vsub.f32 %v139, %v1469
    %1471 = vmatpush1.msra.mxu0 %v1470
    %1472 = vmatprep.subr.mxu0 0.0
    %v1473 = vand.u32 %v140, 4294901760
    %v1474 = vsub.f32 %v140, %v1473
    %1475 = vmatpush1.msra.mxu0 %v1474
    %1476 = vmatprep.subr.mxu0 0.0
    %v1477 = vand.u32 %v141, 4294901760
    %v1478 = vsub.f32 %v141, %v1477
    %1479 = vmatpush1.msra.mxu0 %v1478
    %1480 = vmatprep.subr.mxu0 0.0
    %v1481 = vand.u32 %v142, 4294901760
    %v1482 = vsub.f32 %v142, %v1481
    %1483 = vmatpush1.msra.mxu0 %v1482
    %v1484 = vand.u32 %v78, 4294901760
    %v1485 = vsub.f32 %v78, %v1484
    %1486 = vmatprep.mubr.f32.mxu0 %v1485
    %v1487 = vand.u32 %v77, 4294901760
    %v1488 = vsub.f32 %v77, %v1487
    %1489 = vmatmul.mubr.f32.gmra.mrb[0].mxu0 %v1488
    %v1490 = vpop.f32.mrb[0].mxu0
    %v1491 = vadd.f32 %v1353, %v1490
    %v1492 = vpop.f32.mrb[0].mxu0
    %1493 = vdwg.mxu0
    %1494 = vmatprep.subr.mxu0 0.0
    %v1495 = vand.u32 %v111, 4294901760
    %1496 = vmatpush1.msra.mxu0 %v1495
    %1497 = vmatprep.subr.mxu0 0.0
    %v1498 = vand.u32 %v112, 4294901760
    %1499 = vmatpush1.msra.mxu0 %v1498
    %1500 = vmatprep.subr.mxu0 0.0
    %v1501 = vand.u32 %v113, 4294901760
    %1502 = vmatpush1.msra.mxu0 %v1501
    %1503 = vmatprep.subr.mxu0 0.0
    %v1504 = vand.u32 %v114, 4294901760
    %1505 = vmatpush1.msra.mxu0 %v1504
    %1506 = vmatprep.subr.mxu0 0.0
    %v1507 = vand.u32 %v115, 4294901760
    %1508 = vmatpush1.msra.mxu0 %v1507
    %1509 = vmatprep.subr.mxu0 0.0
    %v1510 = vand.u32 %v116, 4294901760
    %1511 = vmatpush1.msra.mxu0 %v1510
    %1512 = vmatprep.subr.mxu0 0.0
    %v1513 = vand.u32 %v117, 4294901760
    %1514 = vmatpush1.msra.mxu0 %v1513
    %1515 = vmatprep.subr.mxu0 0.0
    %v1516 = vand.u32 %v118, 4294901760
    %1517 = vmatpush1.msra.mxu0 %v1516
    %1518 = vmatprep.subr.mxu0 0.0
    %v1519 = vand.u32 %v119, 4294901760
    %1520 = vmatpush1.msra.mxu0 %v1519
    %1521 = vmatprep.subr.mxu0 0.0
    %v1522 = vand.u32 %v120, 4294901760
    %1523 = vmatpush1.msra.mxu0 %v1522
    %1524 = vmatprep.subr.mxu0 0.0
    %v1525 = vand.u32 %v121, 4294901760
    %1526 = vmatpush1.msra.mxu0 %v1525
    %1527 = vmatprep.subr.mxu0 0.0
    %v1528 = vand.u32 %v122, 4294901760
    %1529 = vmatpush1.msra.mxu0 %v1528
    %1530 = vmatprep.subr.mxu0 0.0
    %v1531 = vand.u32 %v123, 4294901760
    %1532 = vmatpush1.msra.mxu0 %v1531
    %1533 = vmatprep.subr.mxu0 0.0
    %v1534 = vand.u32 %v124, 4294901760
    %1535 = vmatpush1.msra.mxu0 %v1534
    %1536 = vmatprep.subr.mxu0 0.0
    %v1537 = vand.u32 %v125, 4294901760
    %1538 = vmatpush1.msra.mxu0 %v1537
    %1539 = vmatprep.subr.mxu0 0.0
    %v1540 = vand.u32 %v126, 4294901760
    %1541 = vmatpush1.msra.mxu0 %v1540
    %1542 = vmatprep.subr.mxu0 0.0
    %v1543 = vand.u32 %v127, 4294901760
    %1544 = vmatpush1.msra.mxu0 %v1543
    %1545 = vmatprep.subr.mxu0 0.0
    %v1546 = vand.u32 %v128, 4294901760
    %1547 = vmatpush1.msra.mxu0 %v1546
    %1548 = vmatprep.subr.mxu0 0.0
    %v1549 = vand.u32 %v129, 4294901760
    %1550 = vmatpush1.msra.mxu0 %v1549
    %1551 = vmatprep.subr.mxu0 0.0
    %v1552 = vand.u32 %v130, 4294901760
    %1553 = vmatpush1.msra.mxu0 %v1552
    %1554 = vmatprep.subr.mxu0 0.0
    %v1555 = vand.u32 %v131, 4294901760
    %1556 = vmatpush1.msra.mxu0 %v1555
    %1557 = vmatprep.subr.mxu0 0.0
    %v1558 = vand.u32 %v132, 4294901760
    %1559 = vmatpush1.msra.mxu0 %v1558
    %1560 = vmatprep.subr.mxu0 0.0
    %v1561 = vand.u32 %v133, 4294901760
    %1562 = vmatpush1.msra.mxu0 %v1561
    %1563 = vmatprep.subr.mxu0 0.0
    %v1564 = vand.u32 %v134, 4294901760
    %1565 = vmatpush1.msra.mxu0 %v1564
    %1566 = vmatprep.subr.mxu0 0.0
    %v1567 = vand.u32 %v135, 4294901760
    %1568 = vmatpush1.msra.mxu0 %v1567
    %1569 = vmatprep.subr.mxu0 0.0
    %v1570 = vand.u32 %v136, 4294901760
    %1571 = vmatpush1.msra.mxu0 %v1570
    %1572 = vmatprep.subr.mxu0 0.0
    %v1573 = vand.u32 %v137, 4294901760
    %1574 = vmatpush1.msra.mxu0 %v1573
    %1575 = vmatprep.subr.mxu0 0.0
    %v1576 = vand.u32 %v138, 4294901760
    %1577 = vmatpush1.msra.mxu0 %v1576
    %1578 = vmatprep.subr.mxu0 0.0
    %v1579 = vand.u32 %v139, 4294901760
    %1580 = vmatpush1.msra.mxu0 %v1579
    %1581 = vmatprep.subr.mxu0 0.0
    %v1582 = vand.u32 %v140, 4294901760
    %1583 = vmatpush1.msra.mxu0 %v1582
    %1584 = vmatprep.subr.mxu0 0.0
    %v1585 = vand.u32 %v141, 4294901760
    %1586 = vmatpush1.msra.mxu0 %v1585
    %1587 = vmatprep.subr.mxu0 0.0
    %v1588 = vand.u32 %v142, 4294901760
    %1589 = vmatpush1.msra.mxu0 %v1588
    %v1590 = vand.u32 %v78, 4294901760
    %v1591 = vsub.f32 %v78, %v1590
    %v1592 = vand.u32 %v1591, 4294901760
    %1593 = vmatprep.mubr.f32.mxu0 %v1592
    %v1594 = vand.u32 %v77, 4294901760
    %v1595 = vsub.f32 %v77, %v1594
    %v1596 = vand.u32 %v1595, 4294901760
    %1597 = vmatmul.mubr.f32.gmra.mrb[0].mxu0 %v1596
    %v1598 = vpop.f32.mrb[0].mxu0
    %v1599 = vadd.f32 %v1491, %v1598
    %v1600 = vpop.f32.mrb[0].mxu0
    %1601 = vdwg.mxu0
    %1602 = vmatprep.subr.mxu0 0.0
    %v1603 = vand.u32 %v111, 4294901760
    %v1604 = vsub.f32 %v111, %v1603
    %v1605 = vand.u32 %v1604, 4294901760
    %1606 = vmatpush1.msra.mxu0 %v1605
    %1607 = vmatprep.subr.mxu0 0.0
    %v1608 = vand.u32 %v112, 4294901760
    %v1609 = vsub.f32 %v112, %v1608
    %v1610 = vand.u32 %v1609, 4294901760
    %1611 = vmatpush1.msra.mxu0 %v1610
    %1612 = vmatprep.subr.mxu0 0.0
    %v1613 = vand.u32 %v113, 4294901760
    %v1614 = vsub.f32 %v113, %v1613
    %v1615 = vand.u32 %v1614, 4294901760
    %1616 = vmatpush1.msra.mxu0 %v1615
    %1617 = vmatprep.subr.mxu0 0.0
    %v1618 = vand.u32 %v114, 4294901760
    %v1619 = vsub.f32 %v114, %v1618
    %v1620 = vand.u32 %v1619, 4294901760
    %1621 = vmatpush1.msra.mxu0 %v1620
    %1622 = vmatprep.subr.mxu0 0.0
    %v1623 = vand.u32 %v115, 4294901760
    %v1624 = vsub.f32 %v115, %v1623
    %v1625 = vand.u32 %v1624, 4294901760
    %1626 = vmatpush1.msra.mxu0 %v1625
    %1627 = vmatprep.subr.mxu0 0.0
    %v1628 = vand.u32 %v116, 4294901760
    %v1629 = vsub.f32 %v116, %v1628
    %v1630 = vand.u32 %v1629, 4294901760
    %1631 = vmatpush1.msra.mxu0 %v1630
    %1632 = vmatprep.subr.mxu0 0.0
    %v1633 = vand.u32 %v117, 4294901760
    %v1634 = vsub.f32 %v117, %v1633
    %v1635 = vand.u32 %v1634, 4294901760
    %1636 = vmatpush1.msra.mxu0 %v1635
    %1637 = vmatprep.subr.mxu0 0.0
    %v1638 = vand.u32 %v118, 4294901760
    %v1639 = vsub.f32 %v118, %v1638
    %v1640 = vand.u32 %v1639, 4294901760
    %1641 = vmatpush1.msra.mxu0 %v1640
    %1642 = vmatprep.subr.mxu0 0.0
    %v1643 = vand.u32 %v119, 4294901760
    %v1644 = vsub.f32 %v119, %v1643
    %v1645 = vand.u32 %v1644, 4294901760
    %1646 = vmatpush1.msra.mxu0 %v1645
    %1647 = vmatprep.subr.mxu0 0.0
    %v1648 = vand.u32 %v120, 4294901760
    %v1649 = vsub.f32 %v120, %v1648
    %v1650 = vand.u32 %v1649, 4294901760
    %1651 = vmatpush1.msra.mxu0 %v1650
    %1652 = vmatprep.subr.mxu0 0.0
    %v1653 = vand.u32 %v121, 4294901760
    %v1654 = vsub.f32 %v121, %v1653
    %v1655 = vand.u32 %v1654, 4294901760
    %1656 = vmatpush1.msra.mxu0 %v1655
    %1657 = vmatprep.subr.mxu0 0.0
    %v1658 = vand.u32 %v122, 4294901760
    %v1659 = vsub.f32 %v122, %v1658
    %v1660 = vand.u32 %v1659, 4294901760
    %1661 = vmatpush1.msra.mxu0 %v1660
    %1662 = vmatprep.subr.mxu0 0.0
    %v1663 = vand.u32 %v123, 4294901760
    %v1664 = vsub.f32 %v123, %v1663
    %v1665 = vand.u32 %v1664, 4294901760
    %1666 = vmatpush1.msra.mxu0 %v1665
    %1667 = vmatprep.subr.mxu0 0.0
    %v1668 = vand.u32 %v124, 4294901760
    %v1669 = vsub.f32 %v124, %v1668
    %v1670 = vand.u32 %v1669, 4294901760
    %1671 = vmatpush1.msra.mxu0 %v1670
    %1672 = vmatprep.subr.mxu0 0.0
    %v1673 = vand.u32 %v125, 4294901760
    %v1674 = vsub.f32 %v125, %v1673
    %v1675 = vand.u32 %v1674, 4294901760
    %1676 = vmatpush1.msra.mxu0 %v1675
    %1677 = vmatprep.subr.mxu0 0.0
    %v1678 = vand.u32 %v126, 4294901760
    %v1679 = vsub.f32 %v126, %v1678
    %v1680 = vand.u32 %v1679, 4294901760
    %1681 = vmatpush1.msra.mxu0 %v1680
    %1682 = vmatprep.subr.mxu0 0.0
    %v1683 = vand.u32 %v127, 4294901760
    %v1684 = vsub.f32 %v127, %v1683
    %v1685 = vand.u32 %v1684, 4294901760
    %1686 = vmatpush1.msra.mxu0 %v1685
    %1687 = vmatprep.subr.mxu0 0.0
    %v1688 = vand.u32 %v128, 4294901760
    %v1689 = vsub.f32 %v128, %v1688
    %v1690 = vand.u32 %v1689, 4294901760
    %1691 = vmatpush1.msra.mxu0 %v1690
    %1692 = vmatprep.subr.mxu0 0.0
    %v1693 = vand.u32 %v129, 4294901760
    %v1694 = vsub.f32 %v129, %v1693
    %v1695 = vand.u32 %v1694, 4294901760
    %1696 = vmatpush1.msra.mxu0 %v1695
    %1697 = vmatprep.subr.mxu0 0.0
    %v1698 = vand.u32 %v130, 4294901760
    %v1699 = vsub.f32 %v130, %v1698
    %v1700 = vand.u32 %v1699, 4294901760
    %1701 = vmatpush1.msra.mxu0 %v1700
    %1702 = vmatprep.subr.mxu0 0.0
    %v1703 = vand.u32 %v131, 4294901760
    %v1704 = vsub.f32 %v131, %v1703
    %v1705 = vand.u32 %v1704, 4294901760
    %1706 = vmatpush1.msra.mxu0 %v1705
    %1707 = vmatprep.subr.mxu0 0.0
    %v1708 = vand.u32 %v132, 4294901760
    %v1709 = vsub.f32 %v132, %v1708
    %v1710 = vand.u32 %v1709, 4294901760
    %1711 = vmatpush1.msra.mxu0 %v1710
    %1712 = vmatprep.subr.mxu0 0.0
    %v1713 = vand.u32 %v133, 4294901760
    %v1714 = vsub.f32 %v133, %v1713
    %v1715 = vand.u32 %v1714, 4294901760
    %1716 = vmatpush1.msra.mxu0 %v1715
    %1717 = vmatprep.subr.mxu0 0.0
    %v1718 = vand.u32 %v134, 4294901760
    %v1719 = vsub.f32 %v134, %v1718
    %v1720 = vand.u32 %v1719, 4294901760
    %1721 = vmatpush1.msra.mxu0 %v1720
    %1722 = vmatprep.subr.mxu0 0.0
    %v1723 = vand.u32 %v135, 4294901760
    %v1724 = vsub.f32 %v135, %v1723
    %v1725 = vand.u32 %v1724, 4294901760
    %1726 = vmatpush1.msra.mxu0 %v1725
    %1727 = vmatprep.subr.mxu0 0.0
    %v1728 = vand.u32 %v136, 4294901760
    %v1729 = vsub.f32 %v136, %v1728
    %v1730 = vand.u32 %v1729, 4294901760
    %1731 = vmatpush1.msra.mxu0 %v1730
    %1732 = vmatprep.subr.mxu0 0.0
    %v1733 = vand.u32 %v137, 4294901760
    %v1734 = vsub.f32 %v137, %v1733
    %v1735 = vand.u32 %v1734, 4294901760
    %1736 = vmatpush1.msra.mxu0 %v1735
    %1737 = vmatprep.subr.mxu0 0.0
    %v1738 = vand.u32 %v138, 4294901760
    %v1739 = vsub.f32 %v138, %v1738
    %v1740 = vand.u32 %v1739, 4294901760
    %1741 = vmatpush1.msra.mxu0 %v1740
    %1742 = vmatprep.subr.mxu0 0.0
    %v1743 = vand.u32 %v139, 4294901760
    %v1744 = vsub.f32 %v139, %v1743
    %v1745 = vand.u32 %v1744, 4294901760
    %1746 = vmatpush1.msra.mxu0 %v1745
    %1747 = vmatprep.subr.mxu0 0.0
    %v1748 = vand.u32 %v140, 4294901760
    %v1749 = vsub.f32 %v140, %v1748
    %v1750 = vand.u32 %v1749, 4294901760
    %1751 = vmatpush1.msra.mxu0 %v1750
    %1752 = vmatprep.subr.mxu0 0.0
    %v1753 = vand.u32 %v141, 4294901760
    %v1754 = vsub.f32 %v141, %v1753
    %v1755 = vand.u32 %v1754, 4294901760
    %1756 = vmatpush1.msra.mxu0 %v1755
    %1757 = vmatprep.subr.mxu0 0.0
    %v1758 = vand.u32 %v142, 4294901760
    %v1759 = vsub.f32 %v142, %v1758
    %v1760 = vand.u32 %v1759, 4294901760
    %1761 = vmatpush1.msra.mxu0 %v1760
    %v1762 = vand.u32 %v78, 4294901760
    %1763 = vmatprep.mubr.f32.mxu0 %v1762
    %v1764 = vand.u32 %v77, 4294901760
    %1765 = vmatmul.mubr.f32.gmra.mrb[0].mxu0 %v1764
    %v1766 = vpop.f32.mrb[0].mxu0
    %v1767 = vadd.f32 %v1599, %v1766
    %v1768 = vpop.f32.mrb[0].mxu0
    %1769 = vdwg.mxu0
    %1770 = vmatprep.subr.mxu0 0.0
    %v1771 = vand.u32 %v111, 4294901760
    %1772 = vmatpush1.msra.mxu0 %v1771
    %1773 = vmatprep.subr.mxu0 0.0
    %v1774 = vand.u32 %v112, 4294901760
    %1775 = vmatpush1.msra.mxu0 %v1774
    %1776 = vmatprep.subr.mxu0 0.0
    %v1777 = vand.u32 %v113, 4294901760
    %1778 = vmatpush1.msra.mxu0 %v1777
    %1779 = vmatprep.subr.mxu0 0.0
    %v1780 = vand.u32 %v114, 4294901760
    %1781 = vmatpush1.msra.mxu0 %v1780
    %1782 = vmatprep.subr.mxu0 0.0
    %v1783 = vand.u32 %v115, 4294901760
    %1784 = vmatpush1.msra.mxu0 %v1783
    %1785 = vmatprep.subr.mxu0 0.0
    %v1786 = vand.u32 %v116, 4294901760
    %1787 = vmatpush1.msra.mxu0 %v1786
    %1788 = vmatprep.subr.mxu0 0.0
    %v1789 = vand.u32 %v117, 4294901760
    %1790 = vmatpush1.msra.mxu0 %v1789
    %1791 = vmatprep.subr.mxu0 0.0
    %v1792 = vand.u32 %v118, 4294901760
    %1793 = vmatpush1.msra.mxu0 %v1792
    %1794 = vmatprep.subr.mxu0 0.0
    %v1795 = vand.u32 %v119, 4294901760
    %1796 = vmatpush1.msra.mxu0 %v1795
    %1797 = vmatprep.subr.mxu0 0.0
    %v1798 = vand.u32 %v120, 4294901760
    %1799 = vmatpush1.msra.mxu0 %v1798
    %1800 = vmatprep.subr.mxu0 0.0
    %v1801 = vand.u32 %v121, 4294901760
    %1802 = vmatpush1.msra.mxu0 %v1801
    %1803 = vmatprep.subr.mxu0 0.0
    %v1804 = vand.u32 %v122, 4294901760
    %1805 = vmatpush1.msra.mxu0 %v1804
    %1806 = vmatprep.subr.mxu0 0.0
    %v1807 = vand.u32 %v123, 4294901760
    %1808 = vmatpush1.msra.mxu0 %v1807
    %1809 = vmatprep.subr.mxu0 0.0
    %v1810 = vand.u32 %v124, 4294901760
    %1811 = vmatpush1.msra.mxu0 %v1810
    %1812 = vmatprep.subr.mxu0 0.0
    %v1813 = vand.u32 %v125, 4294901760
    %1814 = vmatpush1.msra.mxu0 %v1813
    %1815 = vmatprep.subr.mxu0 0.0
    %v1816 = vand.u32 %v126, 4294901760
    %1817 = vmatpush1.msra.mxu0 %v1816
    %1818 = vmatprep.subr.mxu0 0.0
    %v1819 = vand.u32 %v127, 4294901760
    %1820 = vmatpush1.msra.mxu0 %v1819
    %1821 = vmatprep.subr.mxu0 0.0
    %v1822 = vand.u32 %v128, 4294901760
    %1823 = vmatpush1.msra.mxu0 %v1822
    %1824 = vmatprep.subr.mxu0 0.0
    %v1825 = vand.u32 %v129, 4294901760
    %1826 = vmatpush1.msra.mxu0 %v1825
    %1827 = vmatprep.subr.mxu0 0.0
    %v1828 = vand.u32 %v130, 4294901760
    %1829 = vmatpush1.msra.mxu0 %v1828
    %1830 = vmatprep.subr.mxu0 0.0
    %v1831 = vand.u32 %v131, 4294901760
    %1832 = vmatpush1.msra.mxu0 %v1831
    %1833 = vmatprep.subr.mxu0 0.0
    %v1834 = vand.u32 %v132, 4294901760
    %1835 = vmatpush1.msra.mxu0 %v1834
    %1836 = vmatprep.subr.mxu0 0.0
    %v1837 = vand.u32 %v133, 4294901760
    %1838 = vmatpush1.msra.mxu0 %v1837
    %1839 = vmatprep.subr.mxu0 0.0
    %v1840 = vand.u32 %v134, 4294901760
    %1841 = vmatpush1.msra.mxu0 %v1840
    %1842 = vmatprep.subr.mxu0 0.0
    %v1843 = vand.u32 %v135, 4294901760
    %1844 = vmatpush1.msra.mxu0 %v1843
    %1845 = vmatprep.subr.mxu0 0.0
    %v1846 = vand.u32 %v136, 4294901760
    %1847 = vmatpush1.msra.mxu0 %v1846
    %1848 = vmatprep.subr.mxu0 0.0
    %v1849 = vand.u32 %v137, 4294901760
    %1850 = vmatpush1.msra.mxu0 %v1849
    %1851 = vmatprep.subr.mxu0 0.0
    %v1852 = vand.u32 %v138, 4294901760
    %1853 = vmatpush1.msra.mxu0 %v1852
    %1854 = vmatprep.subr.mxu0 0.0
    %v1855 = vand.u32 %v139, 4294901760
    %1856 = vmatpush1.msra.mxu0 %v1855
    %1857 = vmatprep.subr.mxu0 0.0
    %v1858 = vand.u32 %v140, 4294901760
    %1859 = vmatpush1.msra.mxu0 %v1858
    %1860 = vmatprep.subr.mxu0 0.0
    %v1861 = vand.u32 %v141, 4294901760
    %1862 = vmatpush1.msra.mxu0 %v1861
    %1863 = vmatprep.subr.mxu0 0.0
    %v1864 = vand.u32 %v142, 4294901760
    %1865 = vmatpush1.msra.mxu0 %v1864
    %v1866 = vand.u32 %v78, 4294901760
    %1867 = vmatprep.mubr.f32.mxu0 %v1866
    %v1868 = vand.u32 %v77, 4294901760
    %1869 = vmatmul.mubr.f32.gmra.mrb[0].mxu0 %v1868
    %v1870 = vpop.f32.mrb[0].mxu0
    %v1871 = vadd.f32 %v1767, %v1870
    %v1872 = vpop.f32.mrb[0].mxu0
    %1873 = vdwg.mxu0
    %v1874 = vld [vmem:[%s4] sm:$0x1]
    %v1875 = vld [vmem:[%s5] sm:$0x1]
    %1876 = vadd.xlane.f32.xlu0 %v1871
    %v1877 = vpop.xlane.xlu0 %1876
    %v1878 = vrcp.pop 128.0
    %v1879 = vmul.f32 %v1877, %v1878
    %v1880 = vsub.f32 %v1871, %v1879
    %v1881 = vmul.f32 %v1880, %v1880
    %1882 = vadd.xlane.f32.xlu0 %v1881
    %v1883 = vpop.xlane.xlu0 %1882
    %v1884 = vmul.f32 %v1883, %v1878
    %v1885 = vadd.f32 %v1884, 1e-05
    %v1886 = vrsqrt.pop %v1885
    %v1887 = vmul.f32 %v1880, %v1886
    %v1889 = vlaneseq
    %v1890 = vshrl.u32 %v1889, 7
    %v1891 = vsub.s32 0, %v1890
    %v1892 = vrot.slane %v1874, %v1891
    %v1894 = vmul.f32 %v1887, %v1892
    %v1896 = vlaneseq
    %v1897 = vshrl.u32 %v1896, 7
    %v1898 = vsub.s32 0, %v1897
    %v1899 = vrot.slane %v1875, %v1898
    %v1901 = vadd.f32 %v1894, %v1899
    %v1902 = vmax.f32 %v1901, 0.0
    %1903 = vst [vmem:[%s6] sm:$0xff] %v1902
    // Predicated region
    $region34: #{handcrafted_branch.1} parent=1 // pred_check
      _
    $region35: #{handcrafted_branch.1} parent=1 // pred_check_branch
      %1905 = sbr.rel (0) target = $region37
    $region36: #{handcrafted_branch.1} parent=1 // pred_region
      _
    $region37: #{handcrafted_branch.1} parent=1 // pred_fallthru
      _
    // Predicated region
    $region38: #{handcrafted_branch.1} parent=1 // pred_check
      _
    $region39: #{handcrafted_branch.1} parent=1 // pred_check_branch
      %1907 = sbr.rel (0) target = $region41
    $region40: #{handcrafted_branch.1} parent=1 // pred_region
      _
    $region41: #{handcrafted_branch.1} parent=1 // pred_fallthru
      _
    %1908 = vsyncpa [#allocation3], 1
    %1909 = vsyncpa [#allocation5], 1

</llo_original>
